<compile_context>
chip_gen: v5e
topology: v5e:2x2
jax: 0.10.0
libtpu: 0.0.40
codegen_flags: <defaults>
</compile_context>

<pallas_src>
import functools

import jax
import jax.numpy as jnp
from jax.experimental import pallas as pl
from jax.experimental.pallas import tpu as pltpu


# Scoped-VMEM budget that is safe on every generation (v5e/v6e: 128 MiB
# physical, v7x: only 64 MiB physical).  Block sizes below keep the
# double-buffered working set far under this limit on all three chips.
_VMEM_LIMIT_BYTES = 32 * 1024 * 1024

_GEMM_TILE_M = 512      # lane-axis tile of the fused conv GEMM
_UNPOOL_TILE_R = 256    # row tile of the unpool/add kernel
_UNPOOL_TILE_L = 2048   # lane tile of the unpool/add kernel


def _pick_tile(dim, preferred, quantum):
    """Largest tile <= `preferred` that is a multiple of `quantum`; if the whole
    dim already fits it is used as-is (full-array blocks are exempt from the
    (8, 128) divisibility rule)."""
    if dim <= preferred:
        return dim
    return max((preferred // quantum) * quantum, quantum)


# ----------------------------- Pallas kernels -------------------------------
def _gemm_bn_relu_kernel(p_ref, w_ref, shift_ref, o_ref):
    """Fused conv-as-GEMM + BatchNorm(eval) + ReLU for one (batch, M-tile).

    p_ref:     (1, K, TM)  bf16  channel-major patches (spatial on lanes)
    w_ref:     (Co, K)     bf16  conv weight with BN scale pre-folded
    shift_ref: (Co, 1)     f32   BN shift
    o_ref:     (1, Co, TM)       lane-dense output tile
    """
    acc = jnp.dot(w_ref[...], p_ref[0], preferred_element_type=jnp.float32)
    o_ref[0] = jnp.maximum(acc + shift_ref[...], 0.0).astype(o_ref.dtype)


def conv_bn_relu_gemm(patches, w_mat, shift, *, out_dtype=jnp.float32):
    """out[n] = relu(W @ P[n] + shift) for P: (N, K, M), W: (Co, K).

    Transposed ("channel-major") GEMM: the large spatial dim M is the lane
    axis, so stores are lane-dense/unmasked and the result is already NCHW
    ordered.  Tiled over M with double-buffered pipelining; bf16 operands,
    fp32 accumulation; no host padding of K or Co.
    """
    N, K, M = patches.shape
    Co = w_mat.shape[0]
    tm = _pick_tile(M, _GEMM_TILE_M, 128)
    grid = (N, pl.cdiv(M, tm))
    return pl.pallas_call(
        _gemm_bn_relu_kernel,
        out_shape=jax.ShapeDtypeStruct((N, Co, M), out_dtype),
        grid=grid,
        in_specs=[
            pl.BlockSpec((1, K, tm), lambda n, t: (n, 0, t)),
            pl.BlockSpec((Co, K), lambda n, t: (0, 0)),
            pl.BlockSpec((Co, 1), lambda n, t: (0, 0)),
        ],
        out_specs=pl.BlockSpec((1, Co, tm), lambda n, t: (n, 0, t)),
        compiler_params=pltpu.CompilerParams(
            dimension_semantics=("parallel", "parallel"),
            vmem_limit_bytes=_VMEM_LIMIT_BYTES,
        ),
    )(patches.astype(jnp.bfloat16), w_mat.astype(jnp.bfloat16),
      shift.reshape(Co, 1).astype(jnp.float32))


def _unpool_add_kernel(main_ref, idx_ref, ext_ref, o_ref):
    """MaxUnpool2d(kernel=2) as an elementwise mask on a lane-dense flattened
    (2H*2W) plane, fused with the residual add of the extension branch."""
    tl = o_ref.shape[-1]
    lane = (jax.lax.broadcasted_iota(jnp.int32, o_ref.shape, 1)
            + pl.program_id(1) * tl)
    unpooled = jnp.where(idx_ref[...] == lane, main_ref[...], 0.0)
    o_ref[...] = unpooled + ext_ref[...]


def unpool2x_add(main, max_indices, ext):
    """main/max_indices: (N, C, H, W); ext: (N, C, 2H, 2W) -> (N, C, 2H, 2W).

    Pooled values/indices are 2x2 nearest-neighbour replicated and each
    (2H, 2W) plane is flattened onto the lane axis, so the kernel is pure VPU
    work on lane-dense (TR, TL) tiles and writes the final NCHW output
    directly (no post-transpose pass).
    Note: like PyTorch MaxUnpool2d used right after MaxPool2d(2), indices are
    assumed window-local (each index points inside its own 2x2 window).
    """
    N, C, H, W = main.shape
    H2, W2 = 2 * H, 2 * W
    R, L = N * C, H2 * W2
    main_up = jnp.repeat(jnp.repeat(main.astype(jnp.float32), 2, axis=2),
                         2, axis=3).reshape(R, L)
    idx_up = jnp.repeat(jnp.repeat(max_indices.astype(jnp.int32), 2, axis=2),
                        2, axis=3).reshape(R, L)
    ext_flat = ext.astype(jnp.float32).reshape(R, L)

    tr = _pick_tile(R, _UNPOOL_TILE_R, 8)
    tl = _pick_tile(L, _UNPOOL_TILE_L, 128)
    grid = (pl.cdiv(R, tr), pl.cdiv(L, tl))
    out = pl.pallas_call(
        _unpool_add_kernel,
        out_shape=jax.ShapeDtypeStruct((R, L), jnp.float32),
        grid=grid,
        in_specs=[
            pl.BlockSpec((tr, tl), lambda r, t: (r, t)),
            pl.BlockSpec((tr, tl), lambda r, t: (r, t)),
            pl.BlockSpec((tr, tl), lambda r, t: (r, t)),
        ],
        out_specs=pl.BlockSpec((tr, tl), lambda r, t: (r, t)),
        compiler_params=pltpu.CompilerParams(
            dimension_semantics=("parallel", "parallel"),
            vmem_limit_bytes=_VMEM_LIMIT_BYTES,
        ),
    )(main_up, idx_up, ext_flat)
    return out.reshape(N, C, H2, W2)


# ------------------------------- JAX glue ------------------------------------
def bn_fold(gamma, beta, mean, var, eps=1e-5):
    scale = gamma / jnp.sqrt(var + eps)
    return scale, beta - mean * scale


def conv_weight_mat(w, scale):
    """PyTorch Conv2d weight (Co, Ci, k, k) + per-channel BN scale
    -> (Co, k*k*Ci) matching the channel-major im2col ordering below."""
    Co, Ci, k, _ = w.shape
    return jnp.transpose(w, (0, 2, 3, 1)).reshape(Co, k * k * Ci) * scale[:, None]


# TODO(synk): fuse this k*k patch gather into the GEMM kernel (halo-tile DMA +
# k*k accumulated dots) to remove the remaining k^2 HBM expansion of the patch
# matrix; it is built host-side in bf16 (half-size) for now.
def im2col_nchw(x, k, pad):
    """NCHW -> channel-major patch matrix (N, k*k*C, Ho*Wo), spatial axis last."""
    N, C, H, W = x.shape
    xp = jnp.pad(x.astype(jnp.bfloat16),
                 ((0, 0), (0, 0), (pad, pad), (pad, pad)))
    Ho = H + 2 * pad - k + 1
    Wo = W + 2 * pad - k + 1
    cols = [xp[:, :, ky:ky + Ho, kx:kx + Wo]
            for ky in range(k) for kx in range(k)]
    patches = jnp.stack(cols, axis=1).reshape(N, k * k * C, Ho * Wo)
    return patches, (Ho, Wo)


def deconv3x3_s2_bn_relu(e1, wt, scale, shift, *, out_dtype):
    """ConvTranspose2d(kernel=3, stride=2, padding=1, output_padding=1) + BN +
    ReLU via sub-pixel phase splitting: 4 small convs on the *un-dilated*
    input (no 4x zero-stuffed intermediate, ~4x fewer MXU flops / patch bytes
    than the dilate+valid-conv formulation).

    e1: (N, Ci, H, W);  wt: (Ci, Co, 3, 3)  (PyTorch ConvTranspose2d layout).
    Output pixel (2i+py, 2j+px) only receives weight taps of matching parity:
        py == 0 -> ky = 1                              (single row tap)
        py == 1 -> ky = 2 (dy=0)  or  ky = 0 (dy=1)    (two row taps)
    and likewise for px/kx.  Returns (N, Co, 2H, 2W).
    """
    N, Ci, H, W = e1.shape
    Co = wt.shape[1]
    wf = wt * scale[None, :, None, None]                  # fold BN scale
    e1p = jnp.pad(e1.astype(jnp.bfloat16), ((0, 0), (0, 0), (0, 1), (0, 1)))

    def kidx(parity, d):
        return 1 if parity == 0 else (2 if d == 0 else 0)

    phase = {}
    for py in range(2):
        for px in range(2):
            dys = (0,) if py == 0 else (0, 1)
            dxs = (0,) if px == 0 else (0, 1)
            cols, taps = [], []
            for dy in dys:
                for dx in dxs:
                    cols.append(e1p[:, :, dy:dy + H, dx:dx + W])
                    taps.append(wf[:, :, kidx(py, dy), kidx(px, dx)])  # (Ci, Co)
            patches = jnp.stack(cols, axis=1).reshape(N, len(cols) * Ci, H * W)
            w_mat = jnp.stack(taps, axis=0).reshape(len(taps) * Ci, Co).T
            out = conv_bn_relu_gemm(patches, w_mat, shift, out_dtype=out_dtype)
            phase[(py, px)] = out.reshape(N, Co, H, W)

    # interleave the four phases back into the (2H, 2W) output
    row_e = jnp.stack([phase[(0, 0)], phase[(0, 1)]], axis=-1).reshape(
        N, Co, H, 2 * W)
    row_o = jnp.stack([phase[(1, 0)], phase[(1, 1)]], axis=-1).reshape(
        N, Co, H, 2 * W)
    return jnp.stack([row_e, row_o], axis=3).reshape(N, Co, 2 * H, 2 * W)


def upsampling_bottleneck(x, max_indices, params, kernel_size=3, padding=1):
    """Eval-mode forward of the PyTorch UpsamplingBottleneck module.

    x:           (N, Cin, H, W)   NCHW
    max_indices: (N, Cout, H, W)  flat indices into each (2H, 2W) plane
    Returns      (N, Cout, 2H, 2W).
    Only the relu=True activation path is implemented.
    """
    if kernel_size != 3 or padding != 1:
        raise NotImplementedError(
            "phase-split transposed conv is specialised to kernel_size=3, "
            "padding=1 (the configuration in which the module's own forward "
            "produces matching branch shapes)")
    N, Cin, H, W = x.shape
    Cout = params["main_w"].shape[0]
    Cint = params["ext1_w"].shape[0]

    # ---- main branch: 1x1 conv + BN + ReLU (fused GEMM kernel) ----
    sc, sh = bn_fold(*params["main_bn"])
    main = conv_bn_relu_gemm(x.reshape(N, Cin, H * W),
                             conv_weight_mat(params["main_w"], sc), sh,
                             out_dtype=jnp.float32).reshape(N, Cout, H, W)

    # ---- extension branch ----
    # ext1: 3x3 conv + BN + ReLU
    p1, (H1, W1) = im2col_nchw(x, kernel_size, padding)
    sc, sh = bn_fold(*params["ext1_bn"])
    e1 = conv_bn_relu_gemm(p1, conv_weight_mat(params["ext1_w"], sc), sh,
                           out_dtype=jnp.bfloat16).reshape(N, Cint, H1, W1)

    # ext2: 3x3 transposed conv (stride 2) + BN + ReLU, phase-split
    sc, sh = bn_fold(*params["ext2_bn"])
    e2 = deconv3x3_s2_bn_relu(e1, params["ext2_w"], sc, sh,
                              out_dtype=jnp.bfloat16)

    # ext3: 3x3 conv + BN + ReLU
    p3, (H3, W3) = im2col_nchw(e2, kernel_size, padding)
    sc, sh = bn_fold(*params["ext3_bn"])
    ext = conv_bn_relu_gemm(p3, conv_weight_mat(params["ext3_w"], sc), sh,
                            out_dtype=jnp.float32).reshape(N, Cout, H3, W3)

    # ---- merge: max-unpool(main) + ext (fused elementwise kernel) ----
    return unpool2x_add(main, max_indices, ext)


# --------------------------------- main --------------------------------------
if __name__ == "__main__":
    key = jax.random.PRNGKey(0)
    N, Cin, H, W = 2, 16, 16, 16
    Cout, ratio, k, pad = 8, 4, 3, 1
    Cint = Cin // ratio

    keys = jax.random.split(key, 12)
    x = jax.random.normal(keys[0], (N, Cin, H, W), jnp.float32)

    # max-pool indices consistent with a 2x2 / stride-2 pool over a (2H, 2W) map
    dy = jax.random.randint(keys[1], (N, Cout, H, W), 0, 2)
    dx = jax.random.randint(keys[2], (N, Cout, H, W), 0, 2)
    hh = jnp.arange(H).reshape(1, 1, H, 1)
    ww = jnp.arange(W).reshape(1, 1, 1, W)
    max_indices = ((2 * hh + dy) * (2 * W) + (2 * ww + dx)).astype(jnp.int32)

    def bn_params(kg, c):
        k1, k2, k3, k4 = jax.random.split(kg, 4)
        gamma = 1.0 + 0.1 * jax.random.normal(k1, (c,), jnp.float32)
        beta = 0.05 * jax.random.normal(k2, (c,), jnp.float32)
        mean = 0.1 * jax.random.normal(k3, (c,), jnp.float32)
        var = jax.random.uniform(k4, (c,), jnp.float32, minval=0.5, maxval=1.5)
        return (gamma, beta, mean, var)

    params = {
        "main_w": 0.1 * jax.random.normal(keys[3], (Cout, Cin, 1, 1), jnp.float32),
        "main_bn": bn_params(keys[4], Cout),
        "ext1_w": 0.1 * jax.random.normal(keys[5], (Cint, Cin, k, k), jnp.float32),
        "ext1_bn": bn_params(keys[6], Cint),
        # ConvTranspose2d weight layout: (in_channels, out_channels, kH, kW)
        "ext2_w": 0.1 * jax.random.normal(keys[7], (Cint, Cint, k, k), jnp.float32),
        "ext2_bn": bn_params(keys[8], Cint),
        "ext3_w": 0.1 * jax.random.normal(keys[9], (Cout, Cint, k, k), jnp.float32),
        "ext3_bn": bn_params(keys[10], Cout),
    }

    fwd = jax.jit(functools.partial(upsampling_bottleneck,
                                    kernel_size=k, padding=pad))
    out = jax.block_until_ready(fwd(x, max_indices, params))

    assert out.shape == (N, Cout, 2 * H, 2 * W), out.shape
    assert bool(jnp.all(jnp.isfinite(out)))
    print("KERNEL_OK")
</pallas_src>

<mosaic_0001>
module attributes {stable_mosaic.version = 11 : i64} {
  func.func @_gemm_bn_relu_kernel(%arg0: i32, %arg1: i32, %arg2: memref<1x144x256xbf16, #tpu.memory_space<vmem>>, %arg3: memref<4x144xbf16, #tpu.memory_space<vmem>>, %arg4: memref<4x1xf32, #tpu.memory_space<vmem>>, %arg5: memref<1x4x256xbf16, #tpu.memory_space<vmem>>) attributes {dimension_semantics = [#tpu.dimension_semantics<parallel>, #tpu.dimension_semantics<parallel>], iteration_bounds = array<i64: 2, 1>, scalar_prefetch = 0 : i64, scratch_operands = 0 : i64, tpu.core_type = #tpu.core_type<tc>, window_params = [{transform_indices = @transform_0, window_bounds = array<i64: 1, 144, 256>}, {pipeline_mode = #tpu.pipeline_mode<synchronous>, transform_indices = @transform_1, window_bounds = array<i64: 4, 144>}, {pipeline_mode = #tpu.pipeline_mode<synchronous>, transform_indices = @transform_2, window_bounds = array<i64: 4, 1>}, {transform_indices = @transform_3, window_bounds = array<i64: 1, 4, 256>}]} {
    %c0 = arith.constant 0 : index
    %c0_0 = arith.constant 0 : index
    %0 = vector.load %arg3[%c0, %c0_0] : memref<4x144xbf16, #tpu.memory_space<vmem>>, vector<4x144xbf16>
    %c0_1 = arith.constant 0 : index
    %c0_2 = arith.constant 0 : index
    %c0_3 = arith.constant 0 : index
    %1 = vector.load %arg2[%c0_1, %c0_2, %c0_3] : memref<1x144x256xbf16, #tpu.memory_space<vmem>>, vector<1x144x256xbf16>
    %2 = vector.shape_cast %1 : vector<1x144x256xbf16> to vector<144x256xbf16>
    %cst = arith.constant dense<0.000000e+00> : vector<4x256xf32>
    %3 = tpu.matmul %0, %2, %cst {dimension_numbers = #tpu.dot_dimension_numbers<[1], [0], [0], [1], [0, 0, 1, 1], [], []>} : vector<4x144xbf16>, vector<144x256xbf16>, vector<4x256xf32> -> vector<4x256xf32>
    %c0_4 = arith.constant 0 : index
    %c0_5 = arith.constant 0 : index
    %4 = vector.load %arg4[%c0_4, %c0_5] : memref<4x1xf32, #tpu.memory_space<vmem>>, vector<4x1xf32>
    %5 = vector.broadcast %4 : vector<4x1xf32> to vector<4x256xf32>
    %6 = arith.addf %3, %5 : vector<4x256xf32>
    %cst_6 = arith.constant 0.000000e+00 : f32
    %7 = vector.broadcast %cst_6 : f32 to vector<4x256xf32>
    %8 = arith.maximumf %6, %7 : vector<4x256xf32>
    %9 = arith.truncf %8 : vector<4x256xf32> to vector<4x256xbf16>
    %c0_7 = arith.constant 0 : index
    %c0_8 = arith.constant 0 : index
    %c0_9 = arith.constant 0 : index
    %10 = vector.load %arg5[%c0_7, %c0_8, %c0_9] : memref<1x4x256xbf16, #tpu.memory_space<vmem>>, vector<1x4x256xbf16>
    %11 = vector.shape_cast %10 : vector<1x4x256xbf16> to vector<4x256xbf16>
    %12 = vector.shape_cast %9 : vector<4x256xbf16> to vector<1x4x256xbf16>
    tpu.vector_store %arg5[%c0_7, %c0_8, %c0_9], %12 {strides = array<i32>} : memref<1x4x256xbf16, #tpu.memory_space<vmem>>, vector<1x4x256xbf16>,
    return
  }
  func.func @transform_0(%arg0: i32, %arg1: i32) -> (i32, i32, i32) {
    %c0_i32 = arith.constant 0 : i32
    %c0_i32_0 = arith.constant 0 : i32
    return %arg0, %c0_i32, %arg1 : i32, i32, i32
  }
  func.func @transform_1(%arg0: i32, %arg1: i32) -> (i32, i32) {
    %c0_i32 = arith.constant 0 : i32
    %c0_i32_0 = arith.constant 0 : i32
    %c0_i32_1 = arith.constant 0 : i32
    return %c0_i32, %c0_i32_0 : i32, i32
  }
  func.func @transform_2(%arg0: i32, %arg1: i32) -> (i32, i32) {
    %c0_i32 = arith.constant 0 : i32
    %c0_i32_0 = arith.constant 0 : i32
    %c0_i32_1 = arith.constant 0 : i32
    return %c0_i32, %c0_i32_0 : i32, i32
  }
  func.func @transform_3(%arg0: i32, %arg1: i32) -> (i32, i32, i32) {
    %c0_i32 = arith.constant 0 : i32
    %c0_i32_0 = arith.constant 0 : i32
    return %arg0, %c0_i32, %arg1 : i32, i32, i32
  }
}

module attributes {stable_mosaic.version = 11 : i64} {
  func.func @_gemm_bn_relu_kernel(%arg0: i32, %arg1: i32, %arg2: memref<1x8x256xbf16, #tpu.memory_space<vmem>>, %arg3: memref<4x8xbf16, #tpu.memory_space<vmem>>, %arg4: memref<4x1xf32, #tpu.memory_space<vmem>>, %arg5: memref<1x4x256xbf16, #tpu.memory_space<vmem>>) attributes {dimension_semantics = [#tpu.dimension_semantics<parallel>, #tpu.dimension_semantics<parallel>], iteration_bounds = array<i64: 2, 1>, scalar_prefetch = 0 : i64, scratch_operands = 0 : i64, tpu.core_type = #tpu.core_type<tc>, window_params = [{transform_indices = @transform_0, window_bounds = array<i64: 1, 8, 256>}, {pipeline_mode = #tpu.pipeline_mode<synchronous>, transform_indices = @transform_1, window_bounds = array<i64: 4, 8>}, {pipeline_mode = #tpu.pipeline_mode<synchronous>, transform_indices = @transform_2, window_bounds = array<i64: 4, 1>}, {transform_indices = @transform_3, window_bounds = array<i64: 1, 4, 256>}]} {
    %c0 = arith.constant 0 : index
    %c0_0 = arith.constant 0 : index
    %0 = vector.load %arg3[%c0, %c0_0] : memref<4x8xbf16, #tpu.memory_space<vmem>>, vector<4x8xbf16>
    %c0_1 = arith.constant 0 : index
    %c0_2 = arith.constant 0 : index
    %c0_3 = arith.constant 0 : index
    %1 = vector.load %arg2[%c0_1, %c0_2, %c0_3] : memref<1x8x256xbf16, #tpu.memory_space<vmem>>, vector<1x8x256xbf16>
    %2 = vector.shape_cast %1 : vector<1x8x256xbf16> to vector<8x256xbf16>
    %cst = arith.constant dense<0.000000e+00> : vector<4x256xf32>
    %3 = tpu.matmul %0, %2, %cst {dimension_numbers = #tpu.dot_dimension_numbers<[1], [0], [0], [1], [0, 0, 1, 1], [], []>} : vector<4x8xbf16>, vector<8x256xbf16>, vector<4x256xf32> -> vector<4x256xf32>
    %c0_4 = arith.constant 0 : index
    %c0_5 = arith.constant 0 : index
    %4 = vector.load %arg4[%c0_4, %c0_5] : memref<4x1xf32, #tpu.memory_space<vmem>>, vector<4x1xf32>
    %5 = vector.broadcast %4 : vector<4x1xf32> to vector<4x256xf32>
    %6 = arith.addf %3, %5 : vector<4x256xf32>
    %cst_6 = arith.constant 0.000000e+00 : f32
    %7 = vector.broadcast %cst_6 : f32 to vector<4x256xf32>
    %8 = arith.maximumf %6, %7 : vector<4x256xf32>
    %9 = arith.truncf %8 : vector<4x256xf32> to vector<4x256xbf16>
    %c0_7 = arith.constant 0 : index
    %c0_8 = arith.constant 0 : index
    %c0_9 = arith.constant 0 : index
    %10 = vector.load %arg5[%c0_7, %c0_8, %c0_9] : memref<1x4x256xbf16, #tpu.memory_space<vmem>>, vector<1x4x256xbf16>
    %11 = vector.shape_cast %10 : vector<1x4x256xbf16> to vector<4x256xbf16>
    %12 = vector.shape_cast %9 : vector<4x256xbf16> to vector<1x4x256xbf16>
    tpu.vector_store %arg5[%c0_7, %c0_8, %c0_9], %12 {strides = array<i32>} : memref<1x4x256xbf16, #tpu.memory_space<vmem>>, vector<1x4x256xbf16>,
    return
  }
  func.func @transform_0(%arg0: i32, %arg1: i32) -> (i32, i32, i32) {
    %c0_i32 = arith.constant 0 : i32
    %c0_i32_0 = arith.constant 0 : i32
    return %arg0, %c0_i32, %arg1 : i32, i32, i32
  }
  func.func @transform_1(%arg0: i32, %arg1: i32) -> (i32, i32) {
    %c0_i32 = arith.constant 0 : i32
    %c0_i32_0 = arith.constant 0 : i32
    %c0_i32_1 = arith.constant 0 : i32
    return %c0_i32, %c0_i32_0 : i32, i32
  }
  func.func @transform_2(%arg0: i32, %arg1: i32) -> (i32, i32) {
    %c0_i32 = arith.constant 0 : i32
    %c0_i32_0 = arith.constant 0 : i32
    %c0_i32_1 = arith.constant 0 : i32
    return %c0_i32, %c0_i32_0 : i32, i32
  }
  func.func @transform_3(%arg0: i32, %arg1: i32) -> (i32, i32, i32) {
    %c0_i32 = arith.constant 0 : i32
    %c0_i32_0 = arith.constant 0 : i32
    return %arg0, %c0_i32, %arg1 : i32, i32, i32
  }
}

module attributes {stable_mosaic.version = 11 : i64} {
  func.func @_gemm_bn_relu_kernel(%arg0: i32, %arg1: i32, %arg2: memref<1x4x256xbf16, #tpu.memory_space<vmem>>, %arg3: memref<4x4xbf16, #tpu.memory_space<vmem>>, %arg4: memref<4x1xf32, #tpu.memory_space<vmem>>, %arg5: memref<1x4x256xbf16, #tpu.memory_space<vmem>>) attributes {dimension_semantics = [#tpu.dimension_semantics<parallel>, #tpu.dimension_semantics<parallel>], iteration_bounds = array<i64: 2, 1>, scalar_prefetch = 0 : i64, scratch_operands = 0 : i64, tpu.core_type = #tpu.core_type<tc>, window_params = [{transform_indices = @transform_0, window_bounds = array<i64: 1, 4, 256>}, {pipeline_mode = #tpu.pipeline_mode<synchronous>, transform_indices = @transform_1, window_bounds = array<i64: 4, 4>}, {pipeline_mode = #tpu.pipeline_mode<synchronous>, transform_indices = @transform_2, window_bounds = array<i64: 4, 1>}, {transform_indices = @transform_3, window_bounds = array<i64: 1, 4, 256>}]} {
    %c0 = arith.constant 0 : index
    %c0_0 = arith.constant 0 : index
    %0 = vector.load %arg3[%c0, %c0_0] : memref<4x4xbf16, #tpu.memory_space<vmem>>, vector<4x4xbf16>
    %c0_1 = arith.constant 0 : index
    %c0_2 = arith.constant 0 : index
    %c0_3 = arith.constant 0 : index
    %1 = vector.load %arg2[%c0_1, %c0_2, %c0_3] : memref<1x4x256xbf16, #tpu.memory_space<vmem>>, vector<1x4x256xbf16>
    %2 = vector.shape_cast %1 : vector<1x4x256xbf16> to vector<4x256xbf16>
    %cst = arith.constant dense<0.000000e+00> : vector<4x256xf32>
    %3 = tpu.matmul %0, %2, %cst {dimension_numbers = #tpu.dot_dimension_numbers<[1], [0], [0], [1], [0, 0, 1, 1], [], []>} : vector<4x4xbf16>, vector<4x256xbf16>, vector<4x256xf32> -> vector<4x256xf32>
    %c0_4 = arith.constant 0 : index
    %c0_5 = arith.constant 0 : index
    %4 = vector.load %arg4[%c0_4, %c0_5] : memref<4x1xf32, #tpu.memory_space<vmem>>, vector<4x1xf32>
    %5 = vector.broadcast %4 : vector<4x1xf32> to vector<4x256xf32>
    %6 = arith.addf %3, %5 : vector<4x256xf32>
    %cst_6 = arith.constant 0.000000e+00 : f32
    %7 = vector.broadcast %cst_6 : f32 to vector<4x256xf32>
    %8 = arith.maximumf %6, %7 : vector<4x256xf32>
    %9 = arith.truncf %8 : vector<4x256xf32> to vector<4x256xbf16>
    %c0_7 = arith.constant 0 : index
    %c0_8 = arith.constant 0 : index
    %c0_9 = arith.constant 0 : index
    %10 = vector.load %arg5[%c0_7, %c0_8, %c0_9] : memref<1x4x256xbf16, #tpu.memory_space<vmem>>, vector<1x4x256xbf16>
    %11 = vector.shape_cast %10 : vector<1x4x256xbf16> to vector<4x256xbf16>
    %12 = vector.shape_cast %9 : vector<4x256xbf16> to vector<1x4x256xbf16>
    tpu.vector_store %arg5[%c0_7, %c0_8, %c0_9], %12 {strides = array<i32>} : memref<1x4x256xbf16, #tpu.memory_space<vmem>>, vector<1x4x256xbf16>,
    return
  }
  func.func @transform_0(%arg0: i32, %arg1: i32) -> (i32, i32, i32) {
    %c0_i32 = arith.constant 0 : i32
    %c0_i32_0 = arith.constant 0 : i32
    return %arg0, %c0_i32, %arg1 : i32, i32, i32
  }
  func.func @transform_1(%arg0: i32, %arg1: i32) -> (i32, i32) {
    %c0_i32 = arith.constant 0 : i32
    %c0_i32_0 = arith.constant 0 : i32
    %c0_i32_1 = arith.constant 0 : i32
    return %c0_i32, %c0_i32_0 : i32, i32
  }
  func.func @transform_2(%arg0: i32, %arg1: i32) -> (i32, i32) {
    %c0_i32 = arith.constant 0 : i32
    %c0_i32_0 = arith.constant 0 : i32
    %c0_i32_1 = arith.constant 0 : i32
    return %c0_i32, %c0_i32_0 : i32, i32
  }
  func.func @transform_3(%arg0: i32, %arg1: i32) -> (i32, i32, i32) {
    %c0_i32 = arith.constant 0 : i32
    %c0_i32_0 = arith.constant 0 : i32
    return %arg0, %c0_i32, %arg1 : i32, i32, i32
  }
}

module attributes {stable_mosaic.version = 11 : i64} {
  func.func @_gemm_bn_relu_kernel(%arg0: i32, %arg1: i32, %arg2: memref<1x16x256xbf16, #tpu.memory_space<vmem>>, %arg3: memref<4x16xbf16, #tpu.memory_space<vmem>>, %arg4: memref<4x1xf32, #tpu.memory_space<vmem>>, %arg5: memref<1x4x256xbf16, #tpu.memory_space<vmem>>) attributes {dimension_semantics = [#tpu.dimension_semantics<parallel>, #tpu.dimension_semantics<parallel>], iteration_bounds = array<i64: 2, 1>, scalar_prefetch = 0 : i64, scratch_operands = 0 : i64, tpu.core_type = #tpu.core_type<tc>, window_params = [{transform_indices = @transform_0, window_bounds = array<i64: 1, 16, 256>}, {pipeline_mode = #tpu.pipeline_mode<synchronous>, transform_indices = @transform_1, window_bounds = array<i64: 4, 16>}, {pipeline_mode = #tpu.pipeline_mode<synchronous>, transform_indices = @transform_2, window_bounds = array<i64: 4, 1>}, {transform_indices = @transform_3, window_bounds = array<i64: 1, 4, 256>}]} {
    %c0 = arith.constant 0 : index
    %c0_0 = arith.constant 0 : index
    %0 = vector.load %arg3[%c0, %c0_0] : memref<4x16xbf16, #tpu.memory_space<vmem>>, vector<4x16xbf16>
    %c0_1 = arith.constant 0 : index
    %c0_2 = arith.constant 0 : index
    %c0_3 = arith.constant 0 : index
    %1 = vector.load %arg2[%c0_1, %c0_2, %c0_3] : memref<1x16x256xbf16, #tpu.memory_space<vmem>>, vector<1x16x256xbf16>
    %2 = vector.shape_cast %1 : vector<1x16x256xbf16> to vector<16x256xbf16>
    %cst = arith.constant dense<0.000000e+00> : vector<4x256xf32>
    %3 = tpu.matmul %0, %2, %cst {dimension_numbers = #tpu.dot_dimension_numbers<[1], [0], [0], [1], [0, 0, 1, 1], [], []>} : vector<4x16xbf16>, vector<16x256xbf16>, vector<4x256xf32> -> vector<4x256xf32>
    %c0_4 = arith.constant 0 : index
    %c0_5 = arith.constant 0 : index
    %4 = vector.load %arg4[%c0_4, %c0_5] : memref<4x1xf32, #tpu.memory_space<vmem>>, vector<4x1xf32>
    %5 = vector.broadcast %4 : vector<4x1xf32> to vector<4x256xf32>
    %6 = arith.addf %3, %5 : vector<4x256xf32>
    %cst_6 = arith.constant 0.000000e+00 : f32
    %7 = vector.broadcast %cst_6 : f32 to vector<4x256xf32>
    %8 = arith.maximumf %6, %7 : vector<4x256xf32>
    %9 = arith.truncf %8 : vector<4x256xf32> to vector<4x256xbf16>
    %c0_7 = arith.constant 0 : index
    %c0_8 = arith.constant 0 : index
    %c0_9 = arith.constant 0 : index
    %10 = vector.load %arg5[%c0_7, %c0_8, %c0_9] : memref<1x4x256xbf16, #tpu.memory_space<vmem>>, vector<1x4x256xbf16>
    %11 = vector.shape_cast %10 : vector<1x4x256xbf16> to vector<4x256xbf16>
    %12 = vector.shape_cast %9 : vector<4x256xbf16> to vector<1x4x256xbf16>
    tpu.vector_store %arg5[%c0_7, %c0_8, %c0_9], %12 {strides = array<i32>} : memref<1x4x256xbf16, #tpu.memory_space<vmem>>, vector<1x4x256xbf16>,
    return
  }
  func.func @transform_0(%arg0: i32, %arg1: i32) -> (i32, i32, i32) {
    %c0_i32 = arith.constant 0 : i32
    %c0_i32_0 = arith.constant 0 : i32
    return %arg0, %c0_i32, %arg1 : i32, i32, i32
  }
  func.func @transform_1(%arg0: i32, %arg1: i32) -> (i32, i32) {
    %c0_i32 = arith.constant 0 : i32
    %c0_i32_0 = arith.constant 0 : i32
    %c0_i32_1 = arith.constant 0 : i32
    return %c0_i32, %c0_i32_0 : i32, i32
  }
  func.func @transform_2(%arg0: i32, %arg1: i32) -> (i32, i32) {
    %c0_i32 = arith.constant 0 : i32
    %c0_i32_0 = arith.constant 0 : i32
    %c0_i32_1 = arith.constant 0 : i32
    return %c0_i32, %c0_i32_0 : i32, i32
  }
  func.func @transform_3(%arg0: i32, %arg1: i32) -> (i32, i32, i32) {
    %c0_i32 = arith.constant 0 : i32
    %c0_i32_0 = arith.constant 0 : i32
    return %arg0, %c0_i32, %arg1 : i32, i32, i32
  }
}

module attributes {stable_mosaic.version = 11 : i64} {
  func.func @_gemm_bn_relu_kernel(%arg0: i32, %arg1: i32, %arg2: memref<1x36x512xbf16, #tpu.memory_space<vmem>>, %arg3: memref<8x36xbf16, #tpu.memory_space<vmem>>, %arg4: memref<8x1xf32, #tpu.memory_space<vmem>>, %arg5: memref<1x8x512xf32, #tpu.memory_space<vmem>>) attributes {dimension_semantics = [#tpu.dimension_semantics<parallel>, #tpu.dimension_semantics<parallel>], iteration_bounds = array<i64: 2, 2>, scalar_prefetch = 0 : i64, scratch_operands = 0 : i64, tpu.core_type = #tpu.core_type<tc>, window_params = [{transform_indices = @transform_0, window_bounds = array<i64: 1, 36, 512>}, {pipeline_mode = #tpu.pipeline_mode<synchronous>, transform_indices = @transform_1, window_bounds = array<i64: 8, 36>}, {pipeline_mode = #tpu.pipeline_mode<synchronous>, transform_indices = @transform_2, window_bounds = array<i64: 8, 1>}, {transform_indices = @transform_3, window_bounds = array<i64: 1, 8, 512>}]} {
    %c0 = arith.constant 0 : index
    %c0_0 = arith.constant 0 : index
    %0 = vector.load %arg3[%c0, %c0_0] : memref<8x36xbf16, #tpu.memory_space<vmem>>, vector<8x36xbf16>
    %c0_1 = arith.constant 0 : index
    %c0_2 = arith.constant 0 : index
    %c0_3 = arith.constant 0 : index
    %1 = vector.load %arg2[%c0_1, %c0_2, %c0_3] : memref<1x36x512xbf16, #tpu.memory_space<vmem>>, vector<1x36x512xbf16>
    %2 = vector.shape_cast %1 : vector<1x36x512xbf16> to vector<36x512xbf16>
    %cst = arith.constant dense<0.000000e+00> : vector<8x512xf32>
    %3 = tpu.matmul %0, %2, %cst {dimension_numbers = #tpu.dot_dimension_numbers<[1], [0], [0], [1], [0, 0, 1, 1], [], []>} : vector<8x36xbf16>, vector<36x512xbf16>, vector<8x512xf32> -> vector<8x512xf32>
    %c0_4 = arith.constant 0 : index
    %c0_5 = arith.constant 0 : index
    %4 = vector.load %arg4[%c0_4, %c0_5] : memref<8x1xf32, #tpu.memory_space<vmem>>, vector<8x1xf32>
    %5 = vector.broadcast %4 : vector<8x1xf32> to vector<8x512xf32>
    %6 = arith.addf %3, %5 : vector<8x512xf32>
    %cst_6 = arith.constant 0.000000e+00 : f32
    %7 = vector.broadcast %cst_6 : f32 to vector<8x512xf32>
    %8 = arith.maximumf %6, %7 : vector<8x512xf32>
    %c0_7 = arith.constant 0 : index
    %c0_8 = arith.constant 0 : index
    %c0_9 = arith.constant 0 : index
    %9 = vector.load %arg5[%c0_7, %c0_8, %c0_9] : memref<1x8x512xf32, #tpu.memory_space<vmem>>, vector<1x8x512xf32>
    %10 = vector.shape_cast %9 : vector<1x8x512xf32> to vector<8x512xf32>
    %11 = vector.shape_cast %8 : vector<8x512xf32> to vector<1x8x512xf32>
    tpu.vector_store %arg5[%c0_7, %c0_8, %c0_9], %11 {strides = array<i32>} : memref<1x8x512xf32, #tpu.memory_space<vmem>>, vector<1x8x512xf32>,
    return
  }
  func.func @transform_0(%arg0: i32, %arg1: i32) -> (i32, i32, i32) {
    %c0_i32 = arith.constant 0 : i32
    %c0_i32_0 = arith.constant 0 : i32
    return %arg0, %c0_i32, %arg1 : i32, i32, i32
  }
  func.func @transform_1(%arg0: i32, %arg1: i32) -> (i32, i32) {
    %c0_i32 = arith.constant 0 : i32
    %c0_i32_0 = arith.constant 0 : i32
    %c0_i32_1 = arith.constant 0 : i32
    return %c0_i32, %c0_i32_0 : i32, i32
  }
  func.func @transform_2(%arg0: i32, %arg1: i32) -> (i32, i32) {
    %c0_i32 = arith.constant 0 : i32
    %c0_i32_0 = arith.constant 0 : i32
    %c0_i32_1 = arith.constant 0 : i32
    return %c0_i32, %c0_i32_0 : i32, i32
  }
  func.func @transform_3(%arg0: i32, %arg1: i32) -> (i32, i32, i32) {
    %c0_i32 = arith.constant 0 : i32
    %c0_i32_0 = arith.constant 0 : i32
    return %arg0, %c0_i32, %arg1 : i32, i32, i32
  }
}

module attributes {stable_mosaic.version = 11 : i64} {
  func.func @_gemm_bn_relu_kernel(%arg0: i32, %arg1: i32, %arg2: memref<1x16x256xbf16, #tpu.memory_space<vmem>>, %arg3: memref<8x16xbf16, #tpu.memory_space<vmem>>, %arg4: memref<8x1xf32, #tpu.memory_space<vmem>>, %arg5: memref<1x8x256xf32, #tpu.memory_space<vmem>>) attributes {dimension_semantics = [#tpu.dimension_semantics<parallel>, #tpu.dimension_semantics<parallel>], iteration_bounds = array<i64: 2, 1>, scalar_prefetch = 0 : i64, scratch_operands = 0 : i64, tpu.core_type = #tpu.core_type<tc>, window_params = [{transform_indices = @transform_0, window_bounds = array<i64: 1, 16, 256>}, {pipeline_mode = #tpu.pipeline_mode<synchronous>, transform_indices = @transform_1, window_bounds = array<i64: 8, 16>}, {pipeline_mode = #tpu.pipeline_mode<synchronous>, transform_indices = @transform_2, window_bounds = array<i64: 8, 1>}, {transform_indices = @transform_3, window_bounds = array<i64: 1, 8, 256>}]} {
    %c0 = arith.constant 0 : index
    %c0_0 = arith.constant 0 : index
    %0 = vector.load %arg3[%c0, %c0_0] : memref<8x16xbf16, #tpu.memory_space<vmem>>, vector<8x16xbf16>
    %c0_1 = arith.constant 0 : index
    %c0_2 = arith.constant 0 : index
    %c0_3 = arith.constant 0 : index
    %1 = vector.load %arg2[%c0_1, %c0_2, %c0_3] : memref<1x16x256xbf16, #tpu.memory_space<vmem>>, vector<1x16x256xbf16>
    %2 = vector.shape_cast %1 : vector<1x16x256xbf16> to vector<16x256xbf16>
    %cst = arith.constant dense<0.000000e+00> : vector<8x256xf32>
    %3 = tpu.matmul %0, %2, %cst {dimension_numbers = #tpu.dot_dimension_numbers<[1], [0], [0], [1], [0, 0, 1, 1], [], []>} : vector<8x16xbf16>, vector<16x256xbf16>, vector<8x256xf32> -> vector<8x256xf32>
    %c0_4 = arith.constant 0 : index
    %c0_5 = arith.constant 0 : index
    %4 = vector.load %arg4[%c0_4, %c0_5] : memref<8x1xf32, #tpu.memory_space<vmem>>, vector<8x1xf32>
    %5 = vector.broadcast %4 : vector<8x1xf32> to vector<8x256xf32>
    %6 = arith.addf %3, %5 : vector<8x256xf32>
    %cst_6 = arith.constant 0.000000e+00 : f32
    %7 = vector.broadcast %cst_6 : f32 to vector<8x256xf32>
    %8 = arith.maximumf %6, %7 : vector<8x256xf32>
    %c0_7 = arith.constant 0 : index
    %c0_8 = arith.constant 0 : index
    %c0_9 = arith.constant 0 : index
    %9 = vector.load %arg5[%c0_7, %c0_8, %c0_9] : memref<1x8x256xf32, #tpu.memory_space<vmem>>, vector<1x8x256xf32>
    %10 = vector.shape_cast %9 : vector<1x8x256xf32> to vector<8x256xf32>
    %11 = vector.shape_cast %8 : vector<8x256xf32> to vector<1x8x256xf32>
    tpu.vector_store %arg5[%c0_7, %c0_8, %c0_9], %11 {strides = array<i32>} : memref<1x8x256xf32, #tpu.memory_space<vmem>>, vector<1x8x256xf32>,
    return
  }
  func.func @transform_0(%arg0: i32, %arg1: i32) -> (i32, i32, i32) {
    %c0_i32 = arith.constant 0 : i32
    %c0_i32_0 = arith.constant 0 : i32
    return %arg0, %c0_i32, %arg1 : i32, i32, i32
  }
  func.func @transform_1(%arg0: i32, %arg1: i32) -> (i32, i32) {
    %c0_i32 = arith.constant 0 : i32
    %c0_i32_0 = arith.constant 0 : i32
    %c0_i32_1 = arith.constant 0 : i32
    return %c0_i32, %c0_i32_0 : i32, i32
  }
  func.func @transform_2(%arg0: i32, %arg1: i32) -> (i32, i32) {
    %c0_i32 = arith.constant 0 : i32
    %c0_i32_0 = arith.constant 0 : i32
    %c0_i32_1 = arith.constant 0 : i32
    return %c0_i32, %c0_i32_0 : i32, i32
  }
  func.func @transform_3(%arg0: i32, %arg1: i32) -> (i32, i32, i32) {
    %c0_i32 = arith.constant 0 : i32
    %c0_i32_0 = arith.constant 0 : i32
    return %arg0, %c0_i32, %arg1 : i32, i32, i32
  }
}

module attributes {stable_mosaic.version = 11 : i64} {
  func.func @_unpool_add_kernel(%arg0: i32, %arg1: i32, %arg2: memref<16x1024xf32, #tpu.memory_space<vmem>>, %arg3: memref<16x1024xi32, #tpu.memory_space<vmem>>, %arg4: memref<16x1024xf32, #tpu.memory_space<vmem>>, %arg5: memref<16x1024xf32, #tpu.memory_space<vmem>>) attributes {dimension_semantics = [#tpu.dimension_semantics<parallel>, #tpu.dimension_semantics<parallel>], iteration_bounds = array<i64: 1, 1>, scalar_prefetch = 0 : i64, scratch_operands = 0 : i64, tpu.core_type = #tpu.core_type<tc>, window_params = [{transform_indices = @transform_0, window_bounds = array<i64: 16, 1024>}, {transform_indices = @transform_1, window_bounds = array<i64: 16, 1024>}, {transform_indices = @transform_2, window_bounds = array<i64: 16, 1024>}, {transform_indices = @transform_3, window_bounds = array<i64: 16, 1024>}]} {
    %0 = tpu.iota {dimensions = array<i32: 1>} : vector<16x1024xi32>
    %c1024_i32 = arith.constant 1024 : i32
    %1 = arith.muli %arg1, %c1024_i32 : i32
    %2 = vector.broadcast %1 : i32 to vector<16x1024xi32>
    %3 = arith.addi %0, %2 : vector<16x1024xi32>
    %c0 = arith.constant 0 : index
    %c0_0 = arith.constant 0 : index
    %4 = vector.load %arg3[%c0, %c0_0] : memref<16x1024xi32, #tpu.memory_space<vmem>>, vector<16x1024xi32>
    %5 = arith.cmpi eq, %4, %3 : vector<16x1024xi32>
    %c0_1 = arith.constant 0 : index
    %c0_2 = arith.constant 0 : index
    %6 = vector.load %arg2[%c0_1, %c0_2] : memref<16x1024xf32, #tpu.memory_space<vmem>>, vector<16x1024xf32>
    %cst = arith.constant 0.000000e+00 : f32
    %7 = vector.broadcast %cst : f32 to vector<16x1024xf32>
    %8 = arith.select %5, %6, %7 : vector<16x1024xi1>, vector<16x1024xf32>
    %c0_3 = arith.constant 0 : index
    %c0_4 = arith.constant 0 : index
    %9 = vector.load %arg4[%c0_3, %c0_4] : memref<16x1024xf32, #tpu.memory_space<vmem>>, vector<16x1024xf32>
    %10 = arith.addf %8, %9 : vector<16x1024xf32>
    %c0_5 = arith.constant 0 : index
    %c0_6 = arith.constant 0 : index
    %11 = vector.load %arg5[%c0_5, %c0_6] : memref<16x1024xf32, #tpu.memory_space<vmem>>, vector<16x1024xf32>
    tpu.vector_store %arg5[%c0_5, %c0_6], %10 {strides = array<i32>} : memref<16x1024xf32, #tpu.memory_space<vmem>>, vector<16x1024xf32>,
    return
  }
  func.func @transform_0(%arg0: i32, %arg1: i32) -> (i32, i32) {
    %c0_i32 = arith.constant 0 : i32
    return %arg0, %arg1 : i32, i32
  }
  func.func @transform_1(%arg0: i32, %arg1: i32) -> (i32, i32) {
    %c0_i32 = arith.constant 0 : i32
    return %arg0, %arg1 : i32, i32
  }
  func.func @transform_2(%arg0: i32, %arg1: i32) -> (i32, i32) {
    %c0_i32 = arith.constant 0 : i32
    return %arg0, %arg1 : i32, i32
  }
  func.func @transform_3(%arg0: i32, %arg1: i32) -> (i32, i32) {
    %c0_i32 = arith.constant 0 : i32
    return %arg0, %arg1 : i32, i32
  }
}

</mosaic_0001>

<llo_original>
// kernel: upsampling_bottleneck.9
$region0: #{upsampling_bottleneck.9}
  #allocation0 [shape = 'u32[]', space=smem, size = 0x4, offset = 0x4, fixed_abs, tag = 'smem constant byte address 0x4 - core index']
  #allocation1 [shape = 'u32[72,128]{1,0:T(1,128)}', space=vmem, size = 0x9000, scoped, tag = 'internal scratch']
  %s0 = inlined_call_operand.vmem [shape: bf16[2,144,256], index: 0, kind: input, shape index: {}]
  %s1 = inlined_call_operand.vmem [shape: bf16[4,144], index: 1, kind: input, shape index: {}]
  %s2 = inlined_call_operand.vmem [shape: f32[4,1], index: 2, kind: input, shape index: {}]
  %s3 = inlined_call_operand.vmem [shape: bf16[2,4,256], index: 3, kind: output, shape index: {}]
  %s4 = sld [smem:[#allocation0]]
  $region45: #{upsampling_bottleneck.9} parent=0
    _
  %s6 = ssub.s32 1, %s4
  %s7 = scalar_select 0, %s6, %s4
  loop: start=0, step=1, limit=4
  $region2: #{upsampling_bottleneck.9} parent=0 // loop_pre_header
    _
  $region3: #{upsampling_bottleneck.9} parent=0 // loop_header
    %s9 = sphi 0, %s13
    %p10 = scmp.ge.s32.totalorder %s9, 4
    %s16 = sphi 0, %s28
    %s17 = sphi 0, %s24
    %s18 = sphi 0, %s16
    %s19 = sphi 0, %s17
    %s20 = sphi 0, %s18
    %s21 = sphi 0, %s19
    %s33 = sphi 0, %s35
    %s36 = sphi 0, %s33
    %s37 = sphi 0, %s36
    %s53 = sphi 0, %s37
    %s57 = sphi 0, %s57
    %s59 = sphi 0, %s57
    %s60 = sphi 0, %s59
    %s74 = sphi 0, %s60
    %s78 = sphi 0, %s78
    %s80 = sphi 0, %s78
    %s81 = sphi 0, %s80
    %s95 = sphi 0, %s81
    %s103 = sphi 0, %s105
    %s106 = sphi 0, %s103
    %s107 = sphi 0, %s106
    %s123 = sphi 0, %s107
  $region4: #{upsampling_bottleneck.9} parent=0 // loop_header_branch
    %12 = sbr.rel (%p10) target = $region8
  $region5: #{upsampling_bottleneck.9} parent=0 // loop_body
    %s14 = ssub.s32 %s9, 1
    %s15 = ssub.s32 %s9, 2
    %s22 = sadd.s32 1, %s17
    %p23 = scmp.ge.s32.totalorder %s22, 1
    %s24 = scalar_select %p23, 0, %s22
    %s25 = sadd.s32 1, %s16
    %s26 = scalar_select %p23, %s25, %s16
    %p27 = scmp.ge.s32.totalorder %s26, 2
    %s28 = scalar_select %p27, 0, %s26
    %s29 = ssub.s32 %s16, %s28
    %s30 = ssub.s32 %s17, %s24
    %s31 = sor.u32 %s29, %s30
    %p32 = scmp.eq.s32.totalorder %s31, 0
    %s34 = sadd.s32 %s33, 1
    %s35 = scalar_select %p32, %s33, %s34
    %p38 = pneg %p32
    %p39 = scmp.eq.s32.totalorder %s9, 1
    %p40 = por %p38, %p39
    %p41 = scmp.ne.s32.totalorder %s33, %s36
    %p42 = scmp.eq.s32.totalorder %s9, 0
    %p43 = por %p41, %p42
    %p44 = scmp.ne.s32.totalorder %s33, %s36
    %p45 = scmp.eq.s32.totalorder %s14, 1
    %p46 = por %p44, %p45
    %p47 = scmp.ne.s32.totalorder %s36, %s37
    %p48 = scmp.eq.s32.totalorder %s14, 0
    %p49 = por %p47, %p48
    %p50 = scmp.ne.s32.totalorder %s36, %s37
    %p51 = scmp.eq.s32.totalorder %s15, 1
    %p52 = por %p50, %p51
    %p54 = scmp.ne.s32.totalorder %s37, %s53
    %p55 = scmp.eq.s32.totalorder %s15, 0
    %p56 = por %p54, %p55
    %s58 = sadd.s32 %s57, 1
    %p61 = scmp.eq.s32.totalorder %s9, 1
    %p62 = scmp.ne.s32.totalorder %s57, %s59
    %p63 = scmp.eq.s32.totalorder %s9, 0
    %p64 = por %p62, %p63
    %p65 = scmp.ne.s32.totalorder %s57, %s59
    %p66 = scmp.eq.s32.totalorder %s14, 1
    %p67 = por %p65, %p66
    %p68 = scmp.ne.s32.totalorder %s59, %s60
    %p69 = scmp.eq.s32.totalorder %s14, 0
    %p70 = por %p68, %p69
    %p71 = scmp.ne.s32.totalorder %s59, %s60
    %p72 = scmp.eq.s32.totalorder %s15, 1
    %p73 = por %p71, %p72
    %p75 = scmp.ne.s32.totalorder %s60, %s74
    %p76 = scmp.eq.s32.totalorder %s15, 0
    %p77 = por %p75, %p76
    %s79 = sadd.s32 %s78, 1
    %p82 = scmp.eq.s32.totalorder %s9, 1
    %p83 = scmp.ne.s32.totalorder %s78, %s80
    %p84 = scmp.eq.s32.totalorder %s9, 0
    %p85 = por %p83, %p84
    %p86 = scmp.ne.s32.totalorder %s78, %s80
    %p87 = scmp.eq.s32.totalorder %s14, 1
    %p88 = por %p86, %p87
    %p89 = scmp.ne.s32.totalorder %s80, %s81
    %p90 = scmp.eq.s32.totalorder %s14, 0
    %p91 = por %p89, %p90
    %p92 = scmp.ne.s32.totalorder %s80, %s81
    %p93 = scmp.eq.s32.totalorder %s15, 1
    %p94 = por %p92, %p93
    %p96 = scmp.ne.s32.totalorder %s81, %s95
    %p97 = scmp.eq.s32.totalorder %s15, 0
    %p98 = por %p96, %p97
    %s99 = ssub.s32 %s16, %s28
    %s100 = ssub.s32 %s17, %s24
    %s101 = sor.u32 %s99, %s100
    %p102 = scmp.eq.s32.totalorder %s101, 0
    %s104 = sadd.s32 %s103, 1
    %s105 = scalar_select %p102, %s103, %s104
    %p108 = pneg %p102
    %p109 = scmp.eq.s32.totalorder %s9, 1
    %p110 = por %p108, %p109
    %p111 = scmp.ne.s32.totalorder %s103, %s106
    %p112 = scmp.eq.s32.totalorder %s9, 0
    %p113 = por %p111, %p112
    %p114 = scmp.ne.s32.totalorder %s103, %s106
    %p115 = scmp.eq.s32.totalorder %s14, 1
    %p116 = por %p114, %p115
    %p117 = scmp.ne.s32.totalorder %s106, %s107
    %p118 = scmp.eq.s32.totalorder %s14, 0
    %p119 = por %p117, %p118
    %p120 = scmp.ne.s32.totalorder %s106, %s107
    %p121 = scmp.eq.s32.totalorder %s15, 1
    %p122 = por %p120, %p121
    %p124 = scmp.ne.s32.totalorder %s107, %s123
    %p125 = scmp.eq.s32.totalorder %s15, 0
    %p126 = por %p124, %p125
    %p127 = scmp.le.s32.totalorder 1, %s9
    %p128 = scmp.lt.s32.totalorder %s9, 3
    %p129 = pnand %p127, %p128
    %p130 = pneg %p129
    // Predicated region
    $region9: #{upsampling_bottleneck.9} parent=5 // pred_check
      _
    $region10: #{upsampling_bottleneck.9} parent=5 // pred_check_branch
      %132 = sbr.rel (%p129) target = $region12
    $region11: #{upsampling_bottleneck.9} parent=5 // pred_region
      %s133 = ssub.s32 %s9, 1
      // Predicated region
      $region13: #{upsampling_bottleneck.9} parent=11 // pred_check
        %p134 = pneg %p70
      $region14: #{upsampling_bottleneck.9} parent=11 // pred_check_branch
        %136 = sbr.rel (%p134) target = $region16
      $region15: #{upsampling_bottleneck.9} parent=11 // pred_region
        _
      $region16: #{upsampling_bottleneck.9} parent=11 // pred_fallthru
        _
      // Predicated region
      $region17: #{upsampling_bottleneck.9} parent=11 // pred_check
        %p137 = pneg %p91
      $region18: #{upsampling_bottleneck.9} parent=11 // pred_check_branch
        %139 = sbr.rel (%p137) target = $region20
      $region19: #{upsampling_bottleneck.9} parent=11 // pred_region
        _
      $region20: #{upsampling_bottleneck.9} parent=11 // pred_fallthru
        _
    $region12: #{upsampling_bottleneck.9} parent=5 // pred_fallthru
      _
    %p140 = scmp.lt.s32.totalorder %s9, 2
    // Predicated region
    $region21: #{upsampling_bottleneck.9} parent=5 // pred_check
      %p141 = pneg %p140
    $region22: #{upsampling_bottleneck.9} parent=5 // pred_check_branch
      %143 = sbr.rel (%p141) target = $region24
    $region23: #{upsampling_bottleneck.9} parent=5 // pred_region
      // Predicated region
      $region25: #{upsampling_bottleneck.9} parent=23 // pred_check
        %p144 = pneg %p43
      $region26: #{upsampling_bottleneck.9} parent=23 // pred_check_branch
        %146 = sbr.rel (%p144) target = $region28
      $region27: #{upsampling_bottleneck.9} parent=23 // pred_region
        %s147 = smul.u32 2, %s17
        %p148 = scmp.lt.s32.totalorder %s16, 1
        %s149 = scalar_select %p148, %s16, 1
        %p150 = scmp.lt.s32.totalorder %s147, 1
        %s151 = scalar_select %p150, %s147, 1
        %s152 = smul.addr %s149, 36
        %s153 = sadd.s32 %s151, %s152
        %s154 = smul.addr %s153, 4
        %s155 = scalar_lea.vmem %s0, %s154
        %s156 = smul.u32 2, %s17
      $region28: #{upsampling_bottleneck.9} parent=23 // pred_fallthru
        _
    $region24: #{upsampling_bottleneck.9} parent=5 // pred_fallthru
      _
    %p157 = scmp.le.s32.totalorder 1, %s9
    %p158 = scmp.lt.s32.totalorder %s9, 3
    %p159 = pnand %p157, %p158
    %p160 = pneg %p159
    // Predicated region
    $region29: #{upsampling_bottleneck.9} parent=5 // pred_check
      _
    $region30: #{upsampling_bottleneck.9} parent=5 // pred_check_branch
      %162 = sbr.rel (%p159) target = $region32
    $region31: #{upsampling_bottleneck.9} parent=5 // pred_region
      %s163 = ssub.s32 %s9, 1
      %s164 = smul.u32 2, %s19
      %p165 = scmp.lt.s32.totalorder %s18, 1
      %s166 = scalar_select %p165, %s18, 1
      %p167 = scmp.lt.s32.totalorder %s164, 1
      %s168 = scalar_select %p167, %s164, 1
      %s169 = smul.addr %s166, 36
      %s170 = sadd.s32 %s168, %s169
      %s171 = smul.addr %s170, 4
      %s172 = scalar_lea.vmem %s0, %s171
      %p173 = pneg %p49
      %p174 = pneg %p46
      %p175 = pneg %p70
      %p176 = pneg %p67
      %p177 = pneg %p91
      %p178 = pneg %p88
      %p179 = pneg %p119
      %p180 = pneg %p116
      %s181 = smul.u32 2, %s19
      %p182 = scmp.lt.s32.totalorder %s18, 1
      %s183 = scalar_select %p182, %s18, 1
      %p184 = scmp.lt.s32.totalorder %s181, 1
      %s185 = scalar_select %p184, %s181, 1
      %s186 = smul.addr %s183, 2
      %s187 = sadd.s32 %s185, %s186
      %s188 = smul.addr %s187, 2
      %s189 = scalar_lea.vmem %s3, %s188
      %s190 = smul.u32 2, %s19
      %p191 = scmp.lt.s32.totalorder %s18, 1
      %s192 = scalar_select %p191, %s18, 1
      %p193 = scmp.lt.s32.totalorder %s190, 1
      %s194 = scalar_select %p193, %s190, 1
      %s195 = smul.addr %s192, 36
      %s196 = sadd.s32 %s194, %s195
      %s197 = smul.addr %s196, 4
      %s198 = scalar_lea.vmem %s0, %s197
      %s199 = smul.u32 2, %s19
      %s200 = smul.u32 2, %s19
      %p201 = scmp.lt.s32.totalorder %s18, 1
      %s202 = scalar_select %p201, %s18, 1
      %p203 = scmp.lt.s32.totalorder %s200, 1
      %s204 = scalar_select %p203, %s200, 1
      %s205 = smul.addr %s202, 2
      %s206 = sadd.s32 %s204, %s205
      %s207 = smul.addr %s206, 2
      %s208 = scalar_lea.vmem %s3, %s207
      %s209 = smul.u32 2, %s19
      %v211 = vld [vmem:[%s1] sm:$0xf]
      %v212 = vld [vmem:[%s198] sm:$0xff]
      %v213 = vld [vmem:[%s198 + $0x8] sm:$0xff]
      %v214 = vld [vmem:[%s198 + $0x10] sm:$0xff]
      %v215 = vld [vmem:[%s198 + $0x18] sm:$0xff]
      %v216 = vld [vmem:[%s198 + $0x20] sm:$0xff]
      %v217 = vld [vmem:[%s198 + $0x28] sm:$0xff]
      %v218 = vld [vmem:[%s198 + $0x30] sm:$0xff]
      %v219 = vld [vmem:[%s198 + $0x38] sm:$0xff]
      %v220 = vld [vmem:[%s198 + $0x40] sm:$0xff]
      %v221 = vld [vmem:[%s198 + $0x48] sm:$0xff]
      %v222 = vld [vmem:[%s198 + $0x50] sm:$0xff]
      %v223 = vld [vmem:[%s198 + $0x58] sm:$0xff]
      %v224 = vld [vmem:[%s198 + $0x60] sm:$0xff]
      %v225 = vld [vmem:[%s198 + $0x68] sm:$0xff]
      %v226 = vld [vmem:[%s198 + $0x70] sm:$0xff]
      %v227 = vld [vmem:[%s198 + $0x78] sm:$0xff]
      %v228 = vld [vmem:[%s198 + $0x80] sm:$0xff]
      %v229 = vld [vmem:[%s198 + $0x88] sm:$0xff]
      %v230 = vld [vmem:[%s2] sm:$0xf]
      %232 = vset.pattern.permute.xlu0 0
      %233 = vperm.xlu0 %232, %v230
      %v234 = vpop.permute.xlu0 %233
      %237 = vst [vmem:[#allocation1] ss:$4 sm:$0xff] %v211
      %v238 = vld.sshfl [vmem:[#allocation1] sm:$0xff pattern:$0x73625140]
      %v239 = vld.sshfl [vmem:[#allocation1 + $0x8] sm:$0xff pattern:$0x73625140]
      %v259 = vunpack.c.l.b16 %v212
      %v260 = vunpack.c.h.b16 %v212
      %v261 = vunpack.c.l.b16 %v213
      %v262 = vunpack.c.h.b16 %v213
      %v263 = vunpack.c.l.b16 %v214
      %v264 = vunpack.c.h.b16 %v214
      %v265 = vunpack.c.l.b16 %v215
      %v266 = vunpack.c.h.b16 %v215
      %v267 = vunpack.c.l.b16 %v216
      %v268 = vunpack.c.h.b16 %v216
      %v269 = vunpack.c.l.b16 %v217
      %v270 = vunpack.c.h.b16 %v217
      %v271 = vunpack.c.l.b16 %v218
      %v272 = vunpack.c.h.b16 %v218
      %v273 = vunpack.c.l.b16 %v219
      %v274 = vunpack.c.h.b16 %v219
      %v275 = vunpack.c.l.b16 %v220
      %v276 = vunpack.c.h.b16 %v220
      %v277 = vunpack.c.l.b16 %v221
      %v278 = vunpack.c.h.b16 %v221
      %v279 = vunpack.c.l.b16 %v222
      %v280 = vunpack.c.h.b16 %v222
      %v281 = vunpack.c.l.b16 %v223
      %v282 = vunpack.c.h.b16 %v223
      %v283 = vunpack.c.l.b16 %v224
      %v284 = vunpack.c.h.b16 %v224
      %v285 = vunpack.c.l.b16 %v225
      %v286 = vunpack.c.h.b16 %v225
      %v287 = vunpack.c.l.b16 %v226
      %v288 = vunpack.c.h.b16 %v226
      %v289 = vunpack.c.l.b16 %v227
      %v290 = vunpack.c.h.b16 %v227
      %v291 = vunpack.c.l.b16 %v228
      %v292 = vunpack.c.h.b16 %v228
      %v293 = vunpack.c.l.b16 %v229
      %v294 = vunpack.c.h.b16 %v229
      %v295 = vpack.c.b16 %v261, %v259
      %v296 = vpack.c.b16 %v262, %v260
      %v297 = vpack.c.b16 %v265, %v263
      %v298 = vpack.c.b16 %v266, %v264
      %v299 = vpack.c.b16 %v269, %v267
      %v300 = vpack.c.b16 %v270, %v268
      %v301 = vpack.c.b16 %v273, %v271
      %v302 = vpack.c.b16 %v274, %v272
      %v303 = vpack.c.b16 %v277, %v275
      %v304 = vpack.c.b16 %v278, %v276
      %v305 = vpack.c.b16 %v281, %v279
      %v306 = vpack.c.b16 %v282, %v280
      %v307 = vpack.c.b16 %v285, %v283
      %v308 = vpack.c.b16 %v286, %v284
      %v309 = vpack.c.b16 %v289, %v287
      %v310 = vpack.c.b16 %v290, %v288
      %v311 = vpack.c.b16 %v293, %v291
      %v312 = vpack.c.b16 %v294, %v292
      %vm331 = vcmask 130048
      %v332 = vsel %vm331, %v239, 0
      %334 = vmatpush.bf16.msra.mxu0 %v309
      %335 = vmatpush.bf16.msra.mxu0 %v307
      %336 = vmatpush.bf16.msra.mxu0 %v305
      %337 = vmatpush.bf16.msra.mxu0 %v303
      %338 = vmatpush.bf16.msra.mxu0 %v301
      %339 = vmatpush.bf16.msra.mxu0 %v299
      %340 = vmatpush.bf16.msra.mxu0 %v297
      %341 = vmatpush.bf16.msra.mxu0 %v295
      %342 = vmatmul.bf16.gmra.mxu0 %v238
      %v343 = vpop.f32.mrf.mxu0
      %v344 = vadd.f32 %v234, %v343
      %v345 = vpop.f32.mrf.mxu0
      %346 = vdwg.mxu0
      %347 = vmatpush.bf16.msra.mxu0 0
      %348 = vmatpush.bf16.msra.mxu0 0
      %349 = vmatpush.bf16.msra.mxu0 0
      %350 = vmatpush.bf16.msra.mxu0 0
      %351 = vmatpush.bf16.msra.mxu0 0
      %352 = vmatpush.bf16.msra.mxu0 0
      %353 = vmatpush.bf16.msra.mxu0 0
      %354 = vmatpush.bf16.msra.mxu0 %v311
      %355 = vmatmul.bf16.gmra.mxu0 %v332
      %v356 = vpop.f32.mrf.mxu0
      %v357 = vadd.f32 %v344, %v356
      %v358 = vpop.f32.mrf.mxu0
      %359 = vdwg.mxu0
      %360 = vmatpush.bf16.msra.mxu0 %v310
      %361 = vmatpush.bf16.msra.mxu0 %v308
      %362 = vmatpush.bf16.msra.mxu0 %v306
      %363 = vmatpush.bf16.msra.mxu0 %v304
      %364 = vmatpush.bf16.msra.mxu0 %v302
      %365 = vmatpush.bf16.msra.mxu0 %v300
      %366 = vmatpush.bf16.msra.mxu0 %v298
      %367 = vmatpush.bf16.msra.mxu0 %v296
      %368 = vmatmul.bf16.gmra.mxu0 %v238
      %v369 = vpop.f32.mrf.mxu0
      %v370 = vadd.f32 %v234, %v369
      %v371 = vpop.f32.mrf.mxu0
      %372 = vdwg.mxu0
      %373 = vmatpush.bf16.msra.mxu0 0
      %374 = vmatpush.bf16.msra.mxu0 0
      %375 = vmatpush.bf16.msra.mxu0 0
      %376 = vmatpush.bf16.msra.mxu0 0
      %377 = vmatpush.bf16.msra.mxu0 0
      %378 = vmatpush.bf16.msra.mxu0 0
      %379 = vmatpush.bf16.msra.mxu0 0
      %380 = vmatpush.bf16.msra.mxu0 %v312
      %381 = vmatmul.bf16.gmra.mxu0 %v332
      %v382 = vpop.f32.mrf.mxu0
      %v383 = vadd.f32 %v370, %v382
      %v384 = vpop.f32.mrf.mxu0
      %385 = vdwg.mxu0
      %v386 = vmax.f32 %v357, 0.0
      %v387 = vmax.f32 %v383, 0.0
      %v388 = vpack.c.bf16 %v387, %v386
      %v390 = vrot.slane %v388, 2
      %vm391 = vcmask 1041408
      %v394 = vsel %vm391, %v388, %v390
      %396 = vst [vmem:[%s208] sm:$0xf] %v394
      %s397 = smul.u32 2, %s19
      %p398 = scmp.lt.s32.totalorder %s18, 1
      %s399 = scalar_select %p398, %s18, 1
      %p400 = scmp.lt.s32.totalorder %s397, 1
      %s401 = scalar_select %p400, %s397, 1
      %s402 = smul.addr %s399, 2
      %s403 = sadd.s32 %s401, %s402
      %s404 = smul.addr %s403, 2
      %s405 = scalar_lea.vmem %s3, %s404
      // Predicated region
      $region33: #{upsampling_bottleneck.9} parent=31 // pred_check
        %p406 = pneg %p116
      $region34: #{upsampling_bottleneck.9} parent=31 // pred_check_branch
        %408 = sbr.rel (%p406) target = $region36
      $region35: #{upsampling_bottleneck.9} parent=31 // pred_region
        %s409 = smul.u32 2, %s19
      $region36: #{upsampling_bottleneck.9} parent=31 // pred_fallthru
        _
    $region32: #{upsampling_bottleneck.9} parent=5 // pred_fallthru
      _
    %p410 = scmp.le.s32.totalorder 2, %s9
    // Predicated region
    $region37: #{upsampling_bottleneck.9} parent=5 // pred_check
      %p411 = pneg %p410
    $region38: #{upsampling_bottleneck.9} parent=5 // pred_check_branch
      %413 = sbr.rel (%p411) target = $region40
    $region39: #{upsampling_bottleneck.9} parent=5 // pred_region
      %s414 = ssub.s32 %s9, 2
      // Predicated region
      $region41: #{upsampling_bottleneck.9} parent=39 // pred_check
        %p415 = pneg %p122
      $region42: #{upsampling_bottleneck.9} parent=39 // pred_check_branch
        %417 = sbr.rel (%p415) target = $region44
      $region43: #{upsampling_bottleneck.9} parent=39 // pred_region
        %s418 = smul.u32 2, %s21
        %p419 = scmp.lt.s32.totalorder %s20, 1
        %s420 = scalar_select %p419, %s20, 1
        %p421 = scmp.lt.s32.totalorder %s418, 1
        %s422 = scalar_select %p421, %s418, 1
        %s423 = smul.addr %s420, 2
        %s424 = sadd.s32 %s422, %s423
        %s425 = smul.addr %s424, 2
        %s426 = scalar_lea.vmem %s3, %s425
      $region44: #{upsampling_bottleneck.9} parent=39 // pred_fallthru
        _
    $region40: #{upsampling_bottleneck.9} parent=5 // pred_fallthru
      _
  $region6: #{upsampling_bottleneck.9} parent=0 // loop_footer
    %s13 = sadd.s32 1, %s9
  $region7: #{upsampling_bottleneck.9} parent=0 // loop_footer_branch
    %8 = sbr.rel target = $region3
  $region8: #{upsampling_bottleneck.9} parent=0 // loop_exit
    _

// kernel: upsampling_bottleneck.11
$region0: #{upsampling_bottleneck.11}
  #allocation0 [shape = 'u32[]', space=smem, size = 0x4, offset = 0x4, fixed_abs, tag = 'smem constant byte address 0x4 - core index']
  #allocation1 [shape = 'u32[72,128]{1,0:T(1,128)}', space=vmem, size = 0x9000, scoped, tag = 'internal scratch']
  %s0 = inlined_call_operand.vmem [shape: bf16[2,8,256], index: 0, kind: input, shape index: {}]
  %s1 = inlined_call_operand.vmem [shape: bf16[4,8], index: 1, kind: input, shape index: {}]
  %s2 = inlined_call_operand.vmem [shape: f32[4,1], index: 2, kind: input, shape index: {}]
  %s3 = inlined_call_operand.vmem [shape: bf16[2,4,256], index: 3, kind: output, shape index: {}]
  %s4 = sld [smem:[#allocation0]]
  $region45: #{upsampling_bottleneck.11} parent=0
    _
  %s6 = ssub.s32 1, %s4
  %s7 = scalar_select 0, %s6, %s4
  loop: start=0, step=1, limit=4
  $region2: #{upsampling_bottleneck.11} parent=0 // loop_pre_header
    _
  $region3: #{upsampling_bottleneck.11} parent=0 // loop_header
    %s9 = sphi 0, %s13
    %p10 = scmp.ge.s32.totalorder %s9, 4
    %s16 = sphi 0, %s28
    %s17 = sphi 0, %s24
    %s18 = sphi 0, %s16
    %s19 = sphi 0, %s17
    %s20 = sphi 0, %s18
    %s21 = sphi 0, %s19
    %s33 = sphi 0, %s35
    %s36 = sphi 0, %s33
    %s37 = sphi 0, %s36
    %s53 = sphi 0, %s37
    %s57 = sphi 0, %s57
    %s59 = sphi 0, %s57
    %s60 = sphi 0, %s59
    %s74 = sphi 0, %s60
    %s78 = sphi 0, %s78
    %s80 = sphi 0, %s78
    %s81 = sphi 0, %s80
    %s95 = sphi 0, %s81
    %s103 = sphi 0, %s105
    %s106 = sphi 0, %s103
    %s107 = sphi 0, %s106
    %s123 = sphi 0, %s107
  $region4: #{upsampling_bottleneck.11} parent=0 // loop_header_branch
    %12 = sbr.rel (%p10) target = $region8
  $region5: #{upsampling_bottleneck.11} parent=0 // loop_body
    %s14 = ssub.s32 %s9, 1
    %s15 = ssub.s32 %s9, 2
    %s22 = sadd.s32 1, %s17
    %p23 = scmp.ge.s32.totalorder %s22, 1
    %s24 = scalar_select %p23, 0, %s22
    %s25 = sadd.s32 1, %s16
    %s26 = scalar_select %p23, %s25, %s16
    %p27 = scmp.ge.s32.totalorder %s26, 2
    %s28 = scalar_select %p27, 0, %s26
    %s29 = ssub.s32 %s16, %s28
    %s30 = ssub.s32 %s17, %s24
    %s31 = sor.u32 %s29, %s30
    %p32 = scmp.eq.s32.totalorder %s31, 0
    %s34 = sadd.s32 %s33, 1
    %s35 = scalar_select %p32, %s33, %s34
    %p38 = pneg %p32
    %p39 = scmp.eq.s32.totalorder %s9, 1
    %p40 = por %p38, %p39
    %p41 = scmp.ne.s32.totalorder %s33, %s36
    %p42 = scmp.eq.s32.totalorder %s9, 0
    %p43 = por %p41, %p42
    %p44 = scmp.ne.s32.totalorder %s33, %s36
    %p45 = scmp.eq.s32.totalorder %s14, 1
    %p46 = por %p44, %p45
    %p47 = scmp.ne.s32.totalorder %s36, %s37
    %p48 = scmp.eq.s32.totalorder %s14, 0
    %p49 = por %p47, %p48
    %p50 = scmp.ne.s32.totalorder %s36, %s37
    %p51 = scmp.eq.s32.totalorder %s15, 1
    %p52 = por %p50, %p51
    %p54 = scmp.ne.s32.totalorder %s37, %s53
    %p55 = scmp.eq.s32.totalorder %s15, 0
    %p56 = por %p54, %p55
    %s58 = sadd.s32 %s57, 1
    %p61 = scmp.eq.s32.totalorder %s9, 1
    %p62 = scmp.ne.s32.totalorder %s57, %s59
    %p63 = scmp.eq.s32.totalorder %s9, 0
    %p64 = por %p62, %p63
    %p65 = scmp.ne.s32.totalorder %s57, %s59
    %p66 = scmp.eq.s32.totalorder %s14, 1
    %p67 = por %p65, %p66
    %p68 = scmp.ne.s32.totalorder %s59, %s60
    %p69 = scmp.eq.s32.totalorder %s14, 0
    %p70 = por %p68, %p69
    %p71 = scmp.ne.s32.totalorder %s59, %s60
    %p72 = scmp.eq.s32.totalorder %s15, 1
    %p73 = por %p71, %p72
    %p75 = scmp.ne.s32.totalorder %s60, %s74
    %p76 = scmp.eq.s32.totalorder %s15, 0
    %p77 = por %p75, %p76
    %s79 = sadd.s32 %s78, 1
    %p82 = scmp.eq.s32.totalorder %s9, 1
    %p83 = scmp.ne.s32.totalorder %s78, %s80
    %p84 = scmp.eq.s32.totalorder %s9, 0
    %p85 = por %p83, %p84
    %p86 = scmp.ne.s32.totalorder %s78, %s80
    %p87 = scmp.eq.s32.totalorder %s14, 1
    %p88 = por %p86, %p87
    %p89 = scmp.ne.s32.totalorder %s80, %s81
    %p90 = scmp.eq.s32.totalorder %s14, 0
    %p91 = por %p89, %p90
    %p92 = scmp.ne.s32.totalorder %s80, %s81
    %p93 = scmp.eq.s32.totalorder %s15, 1
    %p94 = por %p92, %p93
    %p96 = scmp.ne.s32.totalorder %s81, %s95
    %p97 = scmp.eq.s32.totalorder %s15, 0
    %p98 = por %p96, %p97
    %s99 = ssub.s32 %s16, %s28
    %s100 = ssub.s32 %s17, %s24
    %s101 = sor.u32 %s99, %s100
    %p102 = scmp.eq.s32.totalorder %s101, 0
    %s104 = sadd.s32 %s103, 1
    %s105 = scalar_select %p102, %s103, %s104
    %p108 = pneg %p102
    %p109 = scmp.eq.s32.totalorder %s9, 1
    %p110 = por %p108, %p109
    %p111 = scmp.ne.s32.totalorder %s103, %s106
    %p112 = scmp.eq.s32.totalorder %s9, 0
    %p113 = por %p111, %p112
    %p114 = scmp.ne.s32.totalorder %s103, %s106
    %p115 = scmp.eq.s32.totalorder %s14, 1
    %p116 = por %p114, %p115
    %p117 = scmp.ne.s32.totalorder %s106, %s107
    %p118 = scmp.eq.s32.totalorder %s14, 0
    %p119 = por %p117, %p118
    %p120 = scmp.ne.s32.totalorder %s106, %s107
    %p121 = scmp.eq.s32.totalorder %s15, 1
    %p122 = por %p120, %p121
    %p124 = scmp.ne.s32.totalorder %s107, %s123
    %p125 = scmp.eq.s32.totalorder %s15, 0
    %p126 = por %p124, %p125
    %p127 = scmp.le.s32.totalorder 1, %s9
    %p128 = scmp.lt.s32.totalorder %s9, 3
    %p129 = pnand %p127, %p128
    %p130 = pneg %p129
    // Predicated region
    $region9: #{upsampling_bottleneck.11} parent=5 // pred_check
      _
    $region10: #{upsampling_bottleneck.11} parent=5 // pred_check_branch
      %132 = sbr.rel (%p129) target = $region12
    $region11: #{upsampling_bottleneck.11} parent=5 // pred_region
      %s133 = ssub.s32 %s9, 1
      // Predicated region
      $region13: #{upsampling_bottleneck.11} parent=11 // pred_check
        %p134 = pneg %p70
      $region14: #{upsampling_bottleneck.11} parent=11 // pred_check_branch
        %136 = sbr.rel (%p134) target = $region16
      $region15: #{upsampling_bottleneck.11} parent=11 // pred_region
        _
      $region16: #{upsampling_bottleneck.11} parent=11 // pred_fallthru
        _
      // Predicated region
      $region17: #{upsampling_bottleneck.11} parent=11 // pred_check
        %p137 = pneg %p91
      $region18: #{upsampling_bottleneck.11} parent=11 // pred_check_branch
        %139 = sbr.rel (%p137) target = $region20
      $region19: #{upsampling_bottleneck.11} parent=11 // pred_region
        _
      $region20: #{upsampling_bottleneck.11} parent=11 // pred_fallthru
        _
    $region12: #{upsampling_bottleneck.11} parent=5 // pred_fallthru
      _
    %p140 = scmp.lt.s32.totalorder %s9, 2
    // Predicated region
    $region21: #{upsampling_bottleneck.11} parent=5 // pred_check
      %p141 = pneg %p140
    $region22: #{upsampling_bottleneck.11} parent=5 // pred_check_branch
      %143 = sbr.rel (%p141) target = $region24
    $region23: #{upsampling_bottleneck.11} parent=5 // pred_region
      // Predicated region
      $region25: #{upsampling_bottleneck.11} parent=23 // pred_check
        %p144 = pneg %p43
      $region26: #{upsampling_bottleneck.11} parent=23 // pred_check_branch
        %146 = sbr.rel (%p144) target = $region28
      $region27: #{upsampling_bottleneck.11} parent=23 // pred_region
        %s147 = smul.u32 2, %s17
        %p148 = scmp.lt.s32.totalorder %s16, 1
        %s149 = scalar_select %p148, %s16, 1
        %p150 = scmp.lt.s32.totalorder %s147, 1
        %s151 = scalar_select %p150, %s147, 1
        %s152 = smul.addr %s149, 2
        %s153 = sadd.s32 %s151, %s152
        %s154 = smul.addr %s153, 4
        %s155 = scalar_lea.vmem %s0, %s154
        %s156 = smul.u32 2, %s17
      $region28: #{upsampling_bottleneck.11} parent=23 // pred_fallthru
        _
    $region24: #{upsampling_bottleneck.11} parent=5 // pred_fallthru
      _
    %p157 = scmp.le.s32.totalorder 1, %s9
    %p158 = scmp.lt.s32.totalorder %s9, 3
    %p159 = pnand %p157, %p158
    %p160 = pneg %p159
    // Predicated region
    $region29: #{upsampling_bottleneck.11} parent=5 // pred_check
      _
    $region30: #{upsampling_bottleneck.11} parent=5 // pred_check_branch
      %162 = sbr.rel (%p159) target = $region32
    $region31: #{upsampling_bottleneck.11} parent=5 // pred_region
      %s163 = ssub.s32 %s9, 1
      %s164 = smul.u32 2, %s19
      %p165 = scmp.lt.s32.totalorder %s18, 1
      %s166 = scalar_select %p165, %s18, 1
      %p167 = scmp.lt.s32.totalorder %s164, 1
      %s168 = scalar_select %p167, %s164, 1
      %s169 = smul.addr %s166, 2
      %s170 = sadd.s32 %s168, %s169
      %s171 = smul.addr %s170, 4
      %s172 = scalar_lea.vmem %s0, %s171
      %p173 = pneg %p49
      %p174 = pneg %p46
      %p175 = pneg %p70
      %p176 = pneg %p67
      %p177 = pneg %p91
      %p178 = pneg %p88
      %p179 = pneg %p119
      %p180 = pneg %p116
      %s181 = smul.u32 2, %s19
      %p182 = scmp.lt.s32.totalorder %s18, 1
      %s183 = scalar_select %p182, %s18, 1
      %p184 = scmp.lt.s32.totalorder %s181, 1
      %s185 = scalar_select %p184, %s181, 1
      %s186 = smul.addr %s183, 2
      %s187 = sadd.s32 %s185, %s186
      %s188 = smul.addr %s187, 2
      %s189 = scalar_lea.vmem %s3, %s188
      %s190 = smul.u32 2, %s19
      %p191 = scmp.lt.s32.totalorder %s18, 1
      %s192 = scalar_select %p191, %s18, 1
      %p193 = scmp.lt.s32.totalorder %s190, 1
      %s194 = scalar_select %p193, %s190, 1
      %s195 = smul.addr %s192, 2
      %s196 = sadd.s32 %s194, %s195
      %s197 = smul.addr %s196, 4
      %s198 = scalar_lea.vmem %s0, %s197
      %s199 = smul.u32 2, %s19
      %s200 = smul.u32 2, %s19
      %p201 = scmp.lt.s32.totalorder %s18, 1
      %s202 = scalar_select %p201, %s18, 1
      %p203 = scmp.lt.s32.totalorder %s200, 1
      %s204 = scalar_select %p203, %s200, 1
      %s205 = smul.addr %s202, 2
      %s206 = sadd.s32 %s204, %s205
      %s207 = smul.addr %s206, 2
      %s208 = scalar_lea.vmem %s3, %s207
      %s209 = smul.u32 2, %s19
      %v211 = vld [vmem:[%s1] sm:$0x3]
      %v212 = vld [vmem:[%s198] sm:$0xff]
      %v213 = vld [vmem:[%s2] sm:$0xf]
      %215 = vset.pattern.permute.xlu0 0
      %216 = vperm.xlu0 %215, %v213
      %v217 = vpop.permute.xlu0 %216
      %v220 = vunpack.c.l.b16 %v212
      %v221 = vunpack.c.h.b16 %v212
      %v222 = vpack.c.b16 %v220, %v220
      %v223 = vpack.c.b16 %v221, %v221
      %vm224 = vcmask 64512
      %v226 = vsel %vm224, %v211, 0
      %vm228 = vcmask 1043456
      %v230 = vsel %vm228, %v222, 0
      %v233 = vsel %vm228, %v223, 0
      %235 = vmatpush.bf16.msra.mxu0 0
      %236 = vmatpush.bf16.msra.mxu0 0
      %237 = vmatpush.bf16.msra.mxu0 0
      %238 = vmatpush.bf16.msra.mxu0 0
      %239 = vmatpush.bf16.msra.mxu0 0
      %240 = vmatpush.bf16.msra.mxu0 0
      %241 = vmatpush.bf16.msra.mxu0 0
      %242 = vmatpush.bf16.msra.mxu0 %v230
      %243 = vmatmul.bf16.gmra.mxu0 %v226
      %v244 = vpop.f32.mrf.mxu0
      %v245 = vadd.f32 %v217, %v244
      %v246 = vpop.f32.mrf.mxu0
      %247 = vdwg.mxu0
      %248 = vmatpush.bf16.msra.mxu0 0
      %249 = vmatpush.bf16.msra.mxu0 0
      %250 = vmatpush.bf16.msra.mxu0 0
      %251 = vmatpush.bf16.msra.mxu0 0
      %252 = vmatpush.bf16.msra.mxu0 0
      %253 = vmatpush.bf16.msra.mxu0 0
      %254 = vmatpush.bf16.msra.mxu0 0
      %255 = vmatpush.bf16.msra.mxu0 %v233
      %256 = vmatmul.bf16.gmra.mxu0 %v226
      %v257 = vpop.f32.mrf.mxu0
      %v258 = vadd.f32 %v217, %v257
      %v259 = vpop.f32.mrf.mxu0
      %260 = vdwg.mxu0
      %v261 = vmax.f32 %v245, 0.0
      %v262 = vmax.f32 %v258, 0.0
      %v263 = vpack.c.bf16 %v262, %v261
      %v265 = vrot.slane %v263, 2
      %vm266 = vcmask 1041408
      %v269 = vsel %vm266, %v263, %v265
      %271 = vst [vmem:[%s208] sm:$0xf] %v269
      %s272 = smul.u32 2, %s19
      %p273 = scmp.lt.s32.totalorder %s18, 1
      %s274 = scalar_select %p273, %s18, 1
      %p275 = scmp.lt.s32.totalorder %s272, 1
      %s276 = scalar_select %p275, %s272, 1
      %s277 = smul.addr %s274, 2
      %s278 = sadd.s32 %s276, %s277
      %s279 = smul.addr %s278, 2
      %s280 = scalar_lea.vmem %s3, %s279
      // Predicated region
      $region33: #{upsampling_bottleneck.11} parent=31 // pred_check
        %p281 = pneg %p116
      $region34: #{upsampling_bottleneck.11} parent=31 // pred_check_branch
        %283 = sbr.rel (%p281) target = $region36
      $region35: #{upsampling_bottleneck.11} parent=31 // pred_region
        %s284 = smul.u32 2, %s19
      $region36: #{upsampling_bottleneck.11} parent=31 // pred_fallthru
        _
    $region32: #{upsampling_bottleneck.11} parent=5 // pred_fallthru
      _
    %p285 = scmp.le.s32.totalorder 2, %s9
    // Predicated region
    $region37: #{upsampling_bottleneck.11} parent=5 // pred_check
      %p286 = pneg %p285
    $region38: #{upsampling_bottleneck.11} parent=5 // pred_check_branch
      %288 = sbr.rel (%p286) target = $region40
    $region39: #{upsampling_bottleneck.11} parent=5 // pred_region
      %s289 = ssub.s32 %s9, 2
      // Predicated region
      $region41: #{upsampling_bottleneck.11} parent=39 // pred_check
        %p290 = pneg %p122
      $region42: #{upsampling_bottleneck.11} parent=39 // pred_check_branch
        %292 = sbr.rel (%p290) target = $region44
      $region43: #{upsampling_bottleneck.11} parent=39 // pred_region
        %s293 = smul.u32 2, %s21
        %p294 = scmp.lt.s32.totalorder %s20, 1
        %s295 = scalar_select %p294, %s20, 1
        %p296 = scmp.lt.s32.totalorder %s293, 1
        %s297 = scalar_select %p296, %s293, 1
        %s298 = smul.addr %s295, 2
        %s299 = sadd.s32 %s297, %s298
        %s300 = smul.addr %s299, 2
        %s301 = scalar_lea.vmem %s3, %s300
      $region44: #{upsampling_bottleneck.11} parent=39 // pred_fallthru
        _
    $region40: #{upsampling_bottleneck.11} parent=5 // pred_fallthru
      _
  $region6: #{upsampling_bottleneck.11} parent=0 // loop_footer
    %s13 = sadd.s32 1, %s9
  $region7: #{upsampling_bottleneck.11} parent=0 // loop_footer_branch
    %8 = sbr.rel target = $region3
  $region8: #{upsampling_bottleneck.11} parent=0 // loop_exit
    _

// kernel: upsampling_bottleneck.10
$region0: #{upsampling_bottleneck.10}
  #allocation0 [shape = 'u32[]', space=smem, size = 0x4, offset = 0x4, fixed_abs, tag = 'smem constant byte address 0x4 - core index']
  #allocation1 [shape = 'u32[72,128]{1,0:T(1,128)}', space=vmem, size = 0x9000, scoped, tag = 'internal scratch']
  %s0 = inlined_call_operand.vmem [shape: bf16[2,4,256], index: 0, kind: input, shape index: {}]
  %s1 = inlined_call_operand.vmem [shape: bf16[4,4], index: 1, kind: input, shape index: {}]
  %s2 = inlined_call_operand.vmem [shape: f32[4,1], index: 2, kind: input, shape index: {}]
  %s3 = inlined_call_operand.vmem [shape: bf16[2,4,256], index: 3, kind: output, shape index: {}]
  %s4 = sld [smem:[#allocation0]]
  $region45: #{upsampling_bottleneck.10} parent=0
    _
  %s6 = ssub.s32 1, %s4
  %s7 = scalar_select 0, %s6, %s4
  loop: start=0, step=1, limit=4
  $region2: #{upsampling_bottleneck.10} parent=0 // loop_pre_header
    _
  $region3: #{upsampling_bottleneck.10} parent=0 // loop_header
    %s9 = sphi 0, %s13
    %p10 = scmp.ge.s32.totalorder %s9, 4
    %s16 = sphi 0, %s28
    %s17 = sphi 0, %s24
    %s18 = sphi 0, %s16
    %s19 = sphi 0, %s17
    %s20 = sphi 0, %s18
    %s21 = sphi 0, %s19
    %s33 = sphi 0, %s35
    %s36 = sphi 0, %s33
    %s37 = sphi 0, %s36
    %s53 = sphi 0, %s37
    %s57 = sphi 0, %s57
    %s59 = sphi 0, %s57
    %s60 = sphi 0, %s59
    %s74 = sphi 0, %s60
    %s78 = sphi 0, %s78
    %s80 = sphi 0, %s78
    %s81 = sphi 0, %s80
    %s95 = sphi 0, %s81
    %s103 = sphi 0, %s105
    %s106 = sphi 0, %s103
    %s107 = sphi 0, %s106
    %s123 = sphi 0, %s107
  $region4: #{upsampling_bottleneck.10} parent=0 // loop_header_branch
    %12 = sbr.rel (%p10) target = $region8
  $region5: #{upsampling_bottleneck.10} parent=0 // loop_body
    %s14 = ssub.s32 %s9, 1
    %s15 = ssub.s32 %s9, 2
    %s22 = sadd.s32 1, %s17
    %p23 = scmp.ge.s32.totalorder %s22, 1
    %s24 = scalar_select %p23, 0, %s22
    %s25 = sadd.s32 1, %s16
    %s26 = scalar_select %p23, %s25, %s16
    %p27 = scmp.ge.s32.totalorder %s26, 2
    %s28 = scalar_select %p27, 0, %s26
    %s29 = ssub.s32 %s16, %s28
    %s30 = ssub.s32 %s17, %s24
    %s31 = sor.u32 %s29, %s30
    %p32 = scmp.eq.s32.totalorder %s31, 0
    %s34 = sadd.s32 %s33, 1
    %s35 = scalar_select %p32, %s33, %s34
    %p38 = pneg %p32
    %p39 = scmp.eq.s32.totalorder %s9, 1
    %p40 = por %p38, %p39
    %p41 = scmp.ne.s32.totalorder %s33, %s36
    %p42 = scmp.eq.s32.totalorder %s9, 0
    %p43 = por %p41, %p42
    %p44 = scmp.ne.s32.totalorder %s33, %s36
    %p45 = scmp.eq.s32.totalorder %s14, 1
    %p46 = por %p44, %p45
    %p47 = scmp.ne.s32.totalorder %s36, %s37
    %p48 = scmp.eq.s32.totalorder %s14, 0
    %p49 = por %p47, %p48
    %p50 = scmp.ne.s32.totalorder %s36, %s37
    %p51 = scmp.eq.s32.totalorder %s15, 1
    %p52 = por %p50, %p51
    %p54 = scmp.ne.s32.totalorder %s37, %s53
    %p55 = scmp.eq.s32.totalorder %s15, 0
    %p56 = por %p54, %p55
    %s58 = sadd.s32 %s57, 1
    %p61 = scmp.eq.s32.totalorder %s9, 1
    %p62 = scmp.ne.s32.totalorder %s57, %s59
    %p63 = scmp.eq.s32.totalorder %s9, 0
    %p64 = por %p62, %p63
    %p65 = scmp.ne.s32.totalorder %s57, %s59
    %p66 = scmp.eq.s32.totalorder %s14, 1
    %p67 = por %p65, %p66
    %p68 = scmp.ne.s32.totalorder %s59, %s60
    %p69 = scmp.eq.s32.totalorder %s14, 0
    %p70 = por %p68, %p69
    %p71 = scmp.ne.s32.totalorder %s59, %s60
    %p72 = scmp.eq.s32.totalorder %s15, 1
    %p73 = por %p71, %p72
    %p75 = scmp.ne.s32.totalorder %s60, %s74
    %p76 = scmp.eq.s32.totalorder %s15, 0
    %p77 = por %p75, %p76
    %s79 = sadd.s32 %s78, 1
    %p82 = scmp.eq.s32.totalorder %s9, 1
    %p83 = scmp.ne.s32.totalorder %s78, %s80
    %p84 = scmp.eq.s32.totalorder %s9, 0
    %p85 = por %p83, %p84
    %p86 = scmp.ne.s32.totalorder %s78, %s80
    %p87 = scmp.eq.s32.totalorder %s14, 1
    %p88 = por %p86, %p87
    %p89 = scmp.ne.s32.totalorder %s80, %s81
    %p90 = scmp.eq.s32.totalorder %s14, 0
    %p91 = por %p89, %p90
    %p92 = scmp.ne.s32.totalorder %s80, %s81
    %p93 = scmp.eq.s32.totalorder %s15, 1
    %p94 = por %p92, %p93
    %p96 = scmp.ne.s32.totalorder %s81, %s95
    %p97 = scmp.eq.s32.totalorder %s15, 0
    %p98 = por %p96, %p97
    %s99 = ssub.s32 %s16, %s28
    %s100 = ssub.s32 %s17, %s24
    %s101 = sor.u32 %s99, %s100
    %p102 = scmp.eq.s32.totalorder %s101, 0
    %s104 = sadd.s32 %s103, 1
    %s105 = scalar_select %p102, %s103, %s104
    %p108 = pneg %p102
    %p109 = scmp.eq.s32.totalorder %s9, 1
    %p110 = por %p108, %p109
    %p111 = scmp.ne.s32.totalorder %s103, %s106
    %p112 = scmp.eq.s32.totalorder %s9, 0
    %p113 = por %p111, %p112
    %p114 = scmp.ne.s32.totalorder %s103, %s106
    %p115 = scmp.eq.s32.totalorder %s14, 1
    %p116 = por %p114, %p115
    %p117 = scmp.ne.s32.totalorder %s106, %s107
    %p118 = scmp.eq.s32.totalorder %s14, 0
    %p119 = por %p117, %p118
    %p120 = scmp.ne.s32.totalorder %s106, %s107
    %p121 = scmp.eq.s32.totalorder %s15, 1
    %p122 = por %p120, %p121
    %p124 = scmp.ne.s32.totalorder %s107, %s123
    %p125 = scmp.eq.s32.totalorder %s15, 0
    %p126 = por %p124, %p125
    %p127 = scmp.le.s32.totalorder 1, %s9
    %p128 = scmp.lt.s32.totalorder %s9, 3
    %p129 = pnand %p127, %p128
    %p130 = pneg %p129
    // Predicated region
    $region9: #{upsampling_bottleneck.10} parent=5 // pred_check
      _
    $region10: #{upsampling_bottleneck.10} parent=5 // pred_check_branch
      %132 = sbr.rel (%p129) target = $region12
    $region11: #{upsampling_bottleneck.10} parent=5 // pred_region
      %s133 = ssub.s32 %s9, 1
      // Predicated region
      $region13: #{upsampling_bottleneck.10} parent=11 // pred_check
        %p134 = pneg %p70
      $region14: #{upsampling_bottleneck.10} parent=11 // pred_check_branch
        %136 = sbr.rel (%p134) target = $region16
      $region15: #{upsampling_bottleneck.10} parent=11 // pred_region
        _
      $region16: #{upsampling_bottleneck.10} parent=11 // pred_fallthru
        _
      // Predicated region
      $region17: #{upsampling_bottleneck.10} parent=11 // pred_check
        %p137 = pneg %p91
      $region18: #{upsampling_bottleneck.10} parent=11 // pred_check_branch
        %139 = sbr.rel (%p137) target = $region20
      $region19: #{upsampling_bottleneck.10} parent=11 // pred_region
        _
      $region20: #{upsampling_bottleneck.10} parent=11 // pred_fallthru
        _
    $region12: #{upsampling_bottleneck.10} parent=5 // pred_fallthru
      _
    %p140 = scmp.lt.s32.totalorder %s9, 2
    // Predicated region
    $region21: #{upsampling_bottleneck.10} parent=5 // pred_check
      %p141 = pneg %p140
    $region22: #{upsampling_bottleneck.10} parent=5 // pred_check_branch
      %143 = sbr.rel (%p141) target = $region24
    $region23: #{upsampling_bottleneck.10} parent=5 // pred_region
      // Predicated region
      $region25: #{upsampling_bottleneck.10} parent=23 // pred_check
        %p144 = pneg %p43
      $region26: #{upsampling_bottleneck.10} parent=23 // pred_check_branch
        %146 = sbr.rel (%p144) target = $region28
      $region27: #{upsampling_bottleneck.10} parent=23 // pred_region
        %s147 = smul.u32 2, %s17
        %p148 = scmp.lt.s32.totalorder %s16, 1
        %s149 = scalar_select %p148, %s16, 1
        %p150 = scmp.lt.s32.totalorder %s147, 1
        %s151 = scalar_select %p150, %s147, 1
        %s152 = smul.addr %s149, 2
        %s153 = sadd.s32 %s151, %s152
        %s154 = smul.addr %s153, 2
        %s155 = scalar_lea.vmem %s0, %s154
        %s156 = smul.u32 2, %s17
      $region28: #{upsampling_bottleneck.10} parent=23 // pred_fallthru
        _
    $region24: #{upsampling_bottleneck.10} parent=5 // pred_fallthru
      _
    %p157 = scmp.le.s32.totalorder 1, %s9
    %p158 = scmp.lt.s32.totalorder %s9, 3
    %p159 = pnand %p157, %p158
    %p160 = pneg %p159
    // Predicated region
    $region29: #{upsampling_bottleneck.10} parent=5 // pred_check
      _
    $region30: #{upsampling_bottleneck.10} parent=5 // pred_check_branch
      %162 = sbr.rel (%p159) target = $region32
    $region31: #{upsampling_bottleneck.10} parent=5 // pred_region
      %s163 = ssub.s32 %s9, 1
      %s164 = smul.u32 2, %s19
      %p165 = scmp.lt.s32.totalorder %s18, 1
      %s166 = scalar_select %p165, %s18, 1
      %p167 = scmp.lt.s32.totalorder %s164, 1
      %s168 = scalar_select %p167, %s164, 1
      %s169 = smul.addr %s166, 2
      %s170 = sadd.s32 %s168, %s169
      %s171 = smul.addr %s170, 2
      %s172 = scalar_lea.vmem %s0, %s171
      %p173 = pneg %p49
      %p174 = pneg %p46
      %p175 = pneg %p70
      %p176 = pneg %p67
      %p177 = pneg %p91
      %p178 = pneg %p88
      %p179 = pneg %p119
      %p180 = pneg %p116
      %s181 = smul.u32 2, %s19
      %p182 = scmp.lt.s32.totalorder %s18, 1
      %s183 = scalar_select %p182, %s18, 1
      %p184 = scmp.lt.s32.totalorder %s181, 1
      %s185 = scalar_select %p184, %s181, 1
      %s186 = smul.addr %s183, 2
      %s187 = sadd.s32 %s185, %s186
      %s188 = smul.addr %s187, 2
      %s189 = scalar_lea.vmem %s3, %s188
      %s190 = smul.u32 2, %s19
      %p191 = scmp.lt.s32.totalorder %s18, 1
      %s192 = scalar_select %p191, %s18, 1
      %p193 = scmp.lt.s32.totalorder %s190, 1
      %s194 = scalar_select %p193, %s190, 1
      %s195 = smul.addr %s192, 2
      %s196 = sadd.s32 %s194, %s195
      %s197 = smul.addr %s196, 2
      %s198 = scalar_lea.vmem %s0, %s197
      %s199 = smul.u32 2, %s19
      %s200 = smul.u32 2, %s19
      %p201 = scmp.lt.s32.totalorder %s18, 1
      %s202 = scalar_select %p201, %s18, 1
      %p203 = scmp.lt.s32.totalorder %s200, 1
      %s204 = scalar_select %p203, %s200, 1
      %s205 = smul.addr %s202, 2
      %s206 = sadd.s32 %s204, %s205
      %s207 = smul.addr %s206, 2
      %s208 = scalar_lea.vmem %s3, %s207
      %s209 = smul.u32 2, %s19
      %v211 = vld [vmem:[%s1] sm:$0x3]
      %v212 = vld [vmem:[%s198] sm:$0xf]
      %v213 = vld [vmem:[%s2] sm:$0xf]
      %215 = vset.pattern.permute.xlu0 0
      %216 = vperm.xlu0 %215, %v213
      %v217 = vpop.permute.xlu0 %216
      %220 = vst [vmem:[#allocation1] ss:$4 sm:$0xff] %v212
      %v221 = vld.sshfl [vmem:[#allocation1] sm:$0xff pattern:$0x73625140]
      %v222 = vld.sshfl [vmem:[#allocation1 + $0x8] sm:$0xff pattern:$0x73625140]
      %vm223 = vcmask 31744
      %v225 = vsel %vm223, %v211, 0
      %vm227 = vcmask 1041408
      %v228 = vsel %vm227, %v221, 0
      %v230 = vsel %vm227, %v222, 0
      %232 = vmatpush.bf16.msra.mxu0 0
      %233 = vmatpush.bf16.msra.mxu0 0
      %234 = vmatpush.bf16.msra.mxu0 0
      %235 = vmatpush.bf16.msra.mxu0 0
      %236 = vmatpush.bf16.msra.mxu0 0
      %237 = vmatpush.bf16.msra.mxu0 0
      %238 = vmatpush.bf16.msra.mxu0 0
      %239 = vmatpush.bf16.msra.mxu0 %v228
      %240 = vmatmul.bf16.gmra.mxu0 %v225
      %v241 = vpop.f32.mrf.mxu0
      %v242 = vadd.f32 %v217, %v241
      %v243 = vpop.f32.mrf.mxu0
      %244 = vdwg.mxu0
      %245 = vmatpush.bf16.msra.mxu0 0
      %246 = vmatpush.bf16.msra.mxu0 0
      %247 = vmatpush.bf16.msra.mxu0 0
      %248 = vmatpush.bf16.msra.mxu0 0
      %249 = vmatpush.bf16.msra.mxu0 0
      %250 = vmatpush.bf16.msra.mxu0 0
      %251 = vmatpush.bf16.msra.mxu0 0
      %252 = vmatpush.bf16.msra.mxu0 %v230
      %253 = vmatmul.bf16.gmra.mxu0 %v225
      %v254 = vpop.f32.mrf.mxu0
      %v255 = vadd.f32 %v217, %v254
      %v256 = vpop.f32.mrf.mxu0
      %257 = vdwg.mxu0
      %v258 = vmax.f32 %v242, 0.0
      %v259 = vmax.f32 %v255, 0.0
      %v260 = vpack.c.bf16 %v259, %v258
      %v262 = vrot.slane %v260, 2
      %v265 = vsel %vm227, %v260, %v262
      %267 = vst [vmem:[%s208] sm:$0xf] %v265
      %s268 = smul.u32 2, %s19
      %p269 = scmp.lt.s32.totalorder %s18, 1
      %s270 = scalar_select %p269, %s18, 1
      %p271 = scmp.lt.s32.totalorder %s268, 1
      %s272 = scalar_select %p271, %s268, 1
      %s273 = smul.addr %s270, 2
      %s274 = sadd.s32 %s272, %s273
      %s275 = smul.addr %s274, 2
      %s276 = scalar_lea.vmem %s3, %s275
      // Predicated region
      $region33: #{upsampling_bottleneck.10} parent=31 // pred_check
        %p277 = pneg %p116
      $region34: #{upsampling_bottleneck.10} parent=31 // pred_check_branch
        %279 = sbr.rel (%p277) target = $region36
      $region35: #{upsampling_bottleneck.10} parent=31 // pred_region
        %s280 = smul.u32 2, %s19
      $region36: #{upsampling_bottleneck.10} parent=31 // pred_fallthru
        _
    $region32: #{upsampling_bottleneck.10} parent=5 // pred_fallthru
      _
    %p281 = scmp.le.s32.totalorder 2, %s9
    // Predicated region
    $region37: #{upsampling_bottleneck.10} parent=5 // pred_check
      %p282 = pneg %p281
    $region38: #{upsampling_bottleneck.10} parent=5 // pred_check_branch
      %284 = sbr.rel (%p282) target = $region40
    $region39: #{upsampling_bottleneck.10} parent=5 // pred_region
      %s285 = ssub.s32 %s9, 2
      // Predicated region
      $region41: #{upsampling_bottleneck.10} parent=39 // pred_check
        %p286 = pneg %p122
      $region42: #{upsampling_bottleneck.10} parent=39 // pred_check_branch
        %288 = sbr.rel (%p286) target = $region44
      $region43: #{upsampling_bottleneck.10} parent=39 // pred_region
        %s289 = smul.u32 2, %s21
        %p290 = scmp.lt.s32.totalorder %s20, 1
        %s291 = scalar_select %p290, %s20, 1
        %p292 = scmp.lt.s32.totalorder %s289, 1
        %s293 = scalar_select %p292, %s289, 1
        %s294 = smul.addr %s291, 2
        %s295 = sadd.s32 %s293, %s294
        %s296 = smul.addr %s295, 2
        %s297 = scalar_lea.vmem %s3, %s296
      $region44: #{upsampling_bottleneck.10} parent=39 // pred_fallthru
        _
    $region40: #{upsampling_bottleneck.10} parent=5 // pred_fallthru
      _
  $region6: #{upsampling_bottleneck.10} parent=0 // loop_footer
    %s13 = sadd.s32 1, %s9
  $region7: #{upsampling_bottleneck.10} parent=0 // loop_footer_branch
    %8 = sbr.rel target = $region3
  $region8: #{upsampling_bottleneck.10} parent=0 // loop_exit
    _

// kernel: upsampling_bottleneck.13
$region0: #{upsampling_bottleneck.13}
  #allocation0 [shape = 'u32[]', space=smem, size = 0x4, offset = 0x4, fixed_abs, tag = 'smem constant byte address 0x4 - core index']
  #allocation1 [shape = 'u32[72,128]{1,0:T(1,128)}', space=vmem, size = 0x9000, scoped, tag = 'internal scratch']
  %s0 = inlined_call_operand.vmem [shape: bf16[2,16,256], index: 0, kind: input, shape index: {}]
  %s1 = inlined_call_operand.vmem [shape: bf16[4,16], index: 1, kind: input, shape index: {}]
  %s2 = inlined_call_operand.vmem [shape: f32[4,1], index: 2, kind: input, shape index: {}]
  %s3 = inlined_call_operand.vmem [shape: bf16[2,4,256], index: 3, kind: output, shape index: {}]
  %s4 = sld [smem:[#allocation0]]
  $region45: #{upsampling_bottleneck.13} parent=0
    _
  %s6 = ssub.s32 1, %s4
  %s7 = scalar_select 0, %s6, %s4
  loop: start=0, step=1, limit=4
  $region2: #{upsampling_bottleneck.13} parent=0 // loop_pre_header
    _
  $region3: #{upsampling_bottleneck.13} parent=0 // loop_header
    %s9 = sphi 0, %s13
    %p10 = scmp.ge.s32.totalorder %s9, 4
    %s16 = sphi 0, %s28
    %s17 = sphi 0, %s24
    %s18 = sphi 0, %s16
    %s19 = sphi 0, %s17
    %s20 = sphi 0, %s18
    %s21 = sphi 0, %s19
    %s33 = sphi 0, %s35
    %s36 = sphi 0, %s33
    %s37 = sphi 0, %s36
    %s53 = sphi 0, %s37
    %s57 = sphi 0, %s57
    %s59 = sphi 0, %s57
    %s60 = sphi 0, %s59
    %s74 = sphi 0, %s60
    %s78 = sphi 0, %s78
    %s80 = sphi 0, %s78
    %s81 = sphi 0, %s80
    %s95 = sphi 0, %s81
    %s103 = sphi 0, %s105
    %s106 = sphi 0, %s103
    %s107 = sphi 0, %s106
    %s123 = sphi 0, %s107
  $region4: #{upsampling_bottleneck.13} parent=0 // loop_header_branch
    %12 = sbr.rel (%p10) target = $region8
  $region5: #{upsampling_bottleneck.13} parent=0 // loop_body
    %s14 = ssub.s32 %s9, 1
    %s15 = ssub.s32 %s9, 2
    %s22 = sadd.s32 1, %s17
    %p23 = scmp.ge.s32.totalorder %s22, 1
    %s24 = scalar_select %p23, 0, %s22
    %s25 = sadd.s32 1, %s16
    %s26 = scalar_select %p23, %s25, %s16
    %p27 = scmp.ge.s32.totalorder %s26, 2
    %s28 = scalar_select %p27, 0, %s26
    %s29 = ssub.s32 %s16, %s28
    %s30 = ssub.s32 %s17, %s24
    %s31 = sor.u32 %s29, %s30
    %p32 = scmp.eq.s32.totalorder %s31, 0
    %s34 = sadd.s32 %s33, 1
    %s35 = scalar_select %p32, %s33, %s34
    %p38 = pneg %p32
    %p39 = scmp.eq.s32.totalorder %s9, 1
    %p40 = por %p38, %p39
    %p41 = scmp.ne.s32.totalorder %s33, %s36
    %p42 = scmp.eq.s32.totalorder %s9, 0
    %p43 = por %p41, %p42
    %p44 = scmp.ne.s32.totalorder %s33, %s36
    %p45 = scmp.eq.s32.totalorder %s14, 1
    %p46 = por %p44, %p45
    %p47 = scmp.ne.s32.totalorder %s36, %s37
    %p48 = scmp.eq.s32.totalorder %s14, 0
    %p49 = por %p47, %p48
    %p50 = scmp.ne.s32.totalorder %s36, %s37
    %p51 = scmp.eq.s32.totalorder %s15, 1
    %p52 = por %p50, %p51
    %p54 = scmp.ne.s32.totalorder %s37, %s53
    %p55 = scmp.eq.s32.totalorder %s15, 0
    %p56 = por %p54, %p55
    %s58 = sadd.s32 %s57, 1
    %p61 = scmp.eq.s32.totalorder %s9, 1
    %p62 = scmp.ne.s32.totalorder %s57, %s59
    %p63 = scmp.eq.s32.totalorder %s9, 0
    %p64 = por %p62, %p63
    %p65 = scmp.ne.s32.totalorder %s57, %s59
    %p66 = scmp.eq.s32.totalorder %s14, 1
    %p67 = por %p65, %p66
    %p68 = scmp.ne.s32.totalorder %s59, %s60
    %p69 = scmp.eq.s32.totalorder %s14, 0
    %p70 = por %p68, %p69
    %p71 = scmp.ne.s32.totalorder %s59, %s60
    %p72 = scmp.eq.s32.totalorder %s15, 1
    %p73 = por %p71, %p72
    %p75 = scmp.ne.s32.totalorder %s60, %s74
    %p76 = scmp.eq.s32.totalorder %s15, 0
    %p77 = por %p75, %p76
    %s79 = sadd.s32 %s78, 1
    %p82 = scmp.eq.s32.totalorder %s9, 1
    %p83 = scmp.ne.s32.totalorder %s78, %s80
    %p84 = scmp.eq.s32.totalorder %s9, 0
    %p85 = por %p83, %p84
    %p86 = scmp.ne.s32.totalorder %s78, %s80
    %p87 = scmp.eq.s32.totalorder %s14, 1
    %p88 = por %p86, %p87
    %p89 = scmp.ne.s32.totalorder %s80, %s81
    %p90 = scmp.eq.s32.totalorder %s14, 0
    %p91 = por %p89, %p90
    %p92 = scmp.ne.s32.totalorder %s80, %s81
    %p93 = scmp.eq.s32.totalorder %s15, 1
    %p94 = por %p92, %p93
    %p96 = scmp.ne.s32.totalorder %s81, %s95
    %p97 = scmp.eq.s32.totalorder %s15, 0
    %p98 = por %p96, %p97
    %s99 = ssub.s32 %s16, %s28
    %s100 = ssub.s32 %s17, %s24
    %s101 = sor.u32 %s99, %s100
    %p102 = scmp.eq.s32.totalorder %s101, 0
    %s104 = sadd.s32 %s103, 1
    %s105 = scalar_select %p102, %s103, %s104
    %p108 = pneg %p102
    %p109 = scmp.eq.s32.totalorder %s9, 1
    %p110 = por %p108, %p109
    %p111 = scmp.ne.s32.totalorder %s103, %s106
    %p112 = scmp.eq.s32.totalorder %s9, 0
    %p113 = por %p111, %p112
    %p114 = scmp.ne.s32.totalorder %s103, %s106
    %p115 = scmp.eq.s32.totalorder %s14, 1
    %p116 = por %p114, %p115
    %p117 = scmp.ne.s32.totalorder %s106, %s107
    %p118 = scmp.eq.s32.totalorder %s14, 0
    %p119 = por %p117, %p118
    %p120 = scmp.ne.s32.totalorder %s106, %s107
    %p121 = scmp.eq.s32.totalorder %s15, 1
    %p122 = por %p120, %p121
    %p124 = scmp.ne.s32.totalorder %s107, %s123
    %p125 = scmp.eq.s32.totalorder %s15, 0
    %p126 = por %p124, %p125
    %p127 = scmp.le.s32.totalorder 1, %s9
    %p128 = scmp.lt.s32.totalorder %s9, 3
    %p129 = pnand %p127, %p128
    %p130 = pneg %p129
    // Predicated region
    $region9: #{upsampling_bottleneck.13} parent=5 // pred_check
      _
    $region10: #{upsampling_bottleneck.13} parent=5 // pred_check_branch
      %132 = sbr.rel (%p129) target = $region12
    $region11: #{upsampling_bottleneck.13} parent=5 // pred_region
      %s133 = ssub.s32 %s9, 1
      // Predicated region
      $region13: #{upsampling_bottleneck.13} parent=11 // pred_check
        %p134 = pneg %p70
      $region14: #{upsampling_bottleneck.13} parent=11 // pred_check_branch
        %136 = sbr.rel (%p134) target = $region16
      $region15: #{upsampling_bottleneck.13} parent=11 // pred_region
        _
      $region16: #{upsampling_bottleneck.13} parent=11 // pred_fallthru
        _
      // Predicated region
      $region17: #{upsampling_bottleneck.13} parent=11 // pred_check
        %p137 = pneg %p91
      $region18: #{upsampling_bottleneck.13} parent=11 // pred_check_branch
        %139 = sbr.rel (%p137) target = $region20
      $region19: #{upsampling_bottleneck.13} parent=11 // pred_region
        _
      $region20: #{upsampling_bottleneck.13} parent=11 // pred_fallthru
        _
    $region12: #{upsampling_bottleneck.13} parent=5 // pred_fallthru
      _
    %p140 = scmp.lt.s32.totalorder %s9, 2
    // Predicated region
    $region21: #{upsampling_bottleneck.13} parent=5 // pred_check
      %p141 = pneg %p140
    $region22: #{upsampling_bottleneck.13} parent=5 // pred_check_branch
      %143 = sbr.rel (%p141) target = $region24
    $region23: #{upsampling_bottleneck.13} parent=5 // pred_region
      // Predicated region
      $region25: #{upsampling_bottleneck.13} parent=23 // pred_check
        %p144 = pneg %p43
      $region26: #{upsampling_bottleneck.13} parent=23 // pred_check_branch
        %146 = sbr.rel (%p144) target = $region28
      $region27: #{upsampling_bottleneck.13} parent=23 // pred_region
        %s147 = smul.u32 2, %s17
        %p148 = scmp.lt.s32.totalorder %s16, 1
        %s149 = scalar_select %p148, %s16, 1
        %p150 = scmp.lt.s32.totalorder %s147, 1
        %s151 = scalar_select %p150, %s147, 1
        %s152 = smul.addr %s149, 4
        %s153 = sadd.s32 %s151, %s152
        %s154 = smul.addr %s153, 4
        %s155 = scalar_lea.vmem %s0, %s154
        %s156 = smul.u32 2, %s17
      $region28: #{upsampling_bottleneck.13} parent=23 // pred_fallthru
        _
    $region24: #{upsampling_bottleneck.13} parent=5 // pred_fallthru
      _
    %p157 = scmp.le.s32.totalorder 1, %s9
    %p158 = scmp.lt.s32.totalorder %s9, 3
    %p159 = pnand %p157, %p158
    %p160 = pneg %p159
    // Predicated region
    $region29: #{upsampling_bottleneck.13} parent=5 // pred_check
      _
    $region30: #{upsampling_bottleneck.13} parent=5 // pred_check_branch
      %162 = sbr.rel (%p159) target = $region32
    $region31: #{upsampling_bottleneck.13} parent=5 // pred_region
      %s163 = ssub.s32 %s9, 1
      %s164 = smul.u32 2, %s19
      %p165 = scmp.lt.s32.totalorder %s18, 1
      %s166 = scalar_select %p165, %s18, 1
      %p167 = scmp.lt.s32.totalorder %s164, 1
      %s168 = scalar_select %p167, %s164, 1
      %s169 = smul.addr %s166, 4
      %s170 = sadd.s32 %s168, %s169
      %s171 = smul.addr %s170, 4
      %s172 = scalar_lea.vmem %s0, %s171
      %p173 = pneg %p49
      %p174 = pneg %p46
      %p175 = pneg %p70
      %p176 = pneg %p67
      %p177 = pneg %p91
      %p178 = pneg %p88
      %p179 = pneg %p119
      %p180 = pneg %p116
      %s181 = smul.u32 2, %s19
      %p182 = scmp.lt.s32.totalorder %s18, 1
      %s183 = scalar_select %p182, %s18, 1
      %p184 = scmp.lt.s32.totalorder %s181, 1
      %s185 = scalar_select %p184, %s181, 1
      %s186 = smul.addr %s183, 2
      %s187 = sadd.s32 %s185, %s186
      %s188 = smul.addr %s187, 2
      %s189 = scalar_lea.vmem %s3, %s188
      %s190 = smul.u32 2, %s19
      %p191 = scmp.lt.s32.totalorder %s18, 1
      %s192 = scalar_select %p191, %s18, 1
      %p193 = scmp.lt.s32.totalorder %s190, 1
      %s194 = scalar_select %p193, %s190, 1
      %s195 = smul.addr %s192, 4
      %s196 = sadd.s32 %s194, %s195
      %s197 = smul.addr %s196, 4
      %s198 = scalar_lea.vmem %s0, %s197
      %s199 = smul.u32 2, %s19
      %s200 = smul.u32 2, %s19
      %p201 = scmp.lt.s32.totalorder %s18, 1
      %s202 = scalar_select %p201, %s18, 1
      %p203 = scmp.lt.s32.totalorder %s200, 1
      %s204 = scalar_select %p203, %s200, 1
      %s205 = smul.addr %s202, 2
      %s206 = sadd.s32 %s204, %s205
      %s207 = smul.addr %s206, 2
      %s208 = scalar_lea.vmem %s3, %s207
      %s209 = smul.u32 2, %s19
      %v211 = vld [vmem:[%s1] sm:$0x3]
      %v212 = vld [vmem:[%s198] sm:$0xff]
      %v213 = vld [vmem:[%s198 + $0x8] sm:$0xff]
      %v214 = vld [vmem:[%s2] sm:$0xf]
      %216 = vset.pattern.permute.xlu0 0
      %217 = vperm.xlu0 %216, %v214
      %v218 = vpop.permute.xlu0 %217
      %v222 = vunpack.c.l.b16 %v212
      %v223 = vunpack.c.h.b16 %v212
      %v224 = vunpack.c.l.b16 %v213
      %v225 = vunpack.c.h.b16 %v213
      %v226 = vpack.c.b16 %v224, %v222
      %v227 = vpack.c.b16 %v225, %v223
      %vm230 = vcmask 130048
      %v232 = vsel %vm230, %v211, 0
      %234 = vmatpush.bf16.msra.mxu0 0
      %235 = vmatpush.bf16.msra.mxu0 0
      %236 = vmatpush.bf16.msra.mxu0 0
      %237 = vmatpush.bf16.msra.mxu0 0
      %238 = vmatpush.bf16.msra.mxu0 0
      %239 = vmatpush.bf16.msra.mxu0 0
      %240 = vmatpush.bf16.msra.mxu0 0
      %241 = vmatpush.bf16.msra.mxu0 %v226
      %242 = vmatmul.bf16.gmra.mxu0 %v232
      %v243 = vpop.f32.mrf.mxu0
      %v244 = vadd.f32 %v218, %v243
      %v245 = vpop.f32.mrf.mxu0
      %246 = vdwg.mxu0
      %247 = vmatpush.bf16.msra.mxu0 0
      %248 = vmatpush.bf16.msra.mxu0 0
      %249 = vmatpush.bf16.msra.mxu0 0
      %250 = vmatpush.bf16.msra.mxu0 0
      %251 = vmatpush.bf16.msra.mxu0 0
      %252 = vmatpush.bf16.msra.mxu0 0
      %253 = vmatpush.bf16.msra.mxu0 0
      %254 = vmatpush.bf16.msra.mxu0 %v227
      %255 = vmatmul.bf16.gmra.mxu0 %v232
      %v256 = vpop.f32.mrf.mxu0
      %v257 = vadd.f32 %v218, %v256
      %v258 = vpop.f32.mrf.mxu0
      %259 = vdwg.mxu0
      %v260 = vmax.f32 %v244, 0.0
      %v261 = vmax.f32 %v257, 0.0
      %v262 = vpack.c.bf16 %v261, %v260
      %v264 = vrot.slane %v262, 2
      %vm265 = vcmask 1041408
      %v268 = vsel %vm265, %v262, %v264
      %270 = vst [vmem:[%s208] sm:$0xf] %v268
      %s271 = smul.u32 2, %s19
      %p272 = scmp.lt.s32.totalorder %s18, 1
      %s273 = scalar_select %p272, %s18, 1
      %p274 = scmp.lt.s32.totalorder %s271, 1
      %s275 = scalar_select %p274, %s271, 1
      %s276 = smul.addr %s273, 2
      %s277 = sadd.s32 %s275, %s276
      %s278 = smul.addr %s277, 2
      %s279 = scalar_lea.vmem %s3, %s278
      // Predicated region
      $region33: #{upsampling_bottleneck.13} parent=31 // pred_check
        %p280 = pneg %p116
      $region34: #{upsampling_bottleneck.13} parent=31 // pred_check_branch
        %282 = sbr.rel (%p280) target = $region36
      $region35: #{upsampling_bottleneck.13} parent=31 // pred_region
        %s283 = smul.u32 2, %s19
      $region36: #{upsampling_bottleneck.13} parent=31 // pred_fallthru
        _
    $region32: #{upsampling_bottleneck.13} parent=5 // pred_fallthru
      _
    %p284 = scmp.le.s32.totalorder 2, %s9
    // Predicated region
    $region37: #{upsampling_bottleneck.13} parent=5 // pred_check
      %p285 = pneg %p284
    $region38: #{upsampling_bottleneck.13} parent=5 // pred_check_branch
      %287 = sbr.rel (%p285) target = $region40
    $region39: #{upsampling_bottleneck.13} parent=5 // pred_region
      %s288 = ssub.s32 %s9, 2
      // Predicated region
      $region41: #{upsampling_bottleneck.13} parent=39 // pred_check
        %p289 = pneg %p122
      $region42: #{upsampling_bottleneck.13} parent=39 // pred_check_branch
        %291 = sbr.rel (%p289) target = $region44
      $region43: #{upsampling_bottleneck.13} parent=39 // pred_region
        %s292 = smul.u32 2, %s21
        %p293 = scmp.lt.s32.totalorder %s20, 1
        %s294 = scalar_select %p293, %s20, 1
        %p295 = scmp.lt.s32.totalorder %s292, 1
        %s296 = scalar_select %p295, %s292, 1
        %s297 = smul.addr %s294, 2
        %s298 = sadd.s32 %s296, %s297
        %s299 = smul.addr %s298, 2
        %s300 = scalar_lea.vmem %s3, %s299
      $region44: #{upsampling_bottleneck.13} parent=39 // pred_fallthru
        _
    $region40: #{upsampling_bottleneck.13} parent=5 // pred_fallthru
      _
  $region6: #{upsampling_bottleneck.13} parent=0 // loop_footer
    %s13 = sadd.s32 1, %s9
  $region7: #{upsampling_bottleneck.13} parent=0 // loop_footer_branch
    %8 = sbr.rel target = $region3
  $region8: #{upsampling_bottleneck.13} parent=0 // loop_exit
    _

// kernel: upsampling_bottleneck.14
$region0: #{upsampling_bottleneck.14}
  #allocation0 [shape = 'u32[]', space=smem, size = 0x4, offset = 0x4, fixed_abs, tag = 'smem constant byte address 0x4 - core index']
  #allocation1 [shape = 'u32[72,128]{1,0:T(1,128)}', space=vmem, size = 0x9000, scoped, tag = 'internal scratch']
  %s0 = inlined_call_operand.vmem [shape: bf16[2,36,1024], index: 0, kind: input, shape index: {}]
  %s1 = inlined_call_operand.vmem [shape: bf16[8,36], index: 1, kind: input, shape index: {}]
  %s2 = inlined_call_operand.vmem [shape: f32[8,1], index: 2, kind: input, shape index: {}]
  %s3 = inlined_call_operand.vmem [shape: f32[2,8,1024], index: 3, kind: output, shape index: {}]
  %s4 = sld [smem:[#allocation0]]
  $region68: #{upsampling_bottleneck.14} parent=0
    _
  %s6 = ssub.s32 1, %s4
  %s7 = scalar_select 0, %s6, %s4
  $region1: #{upsampling_bottleneck.14} parent=0
    #allocation2 [shape = 'u8[81920]{0}', space=vmem, size = 0x14000, scoped, tag = 'input window, operand 0']
    loop: start=0, step=1, limit=6
    $region2: #{upsampling_bottleneck.14} parent=1 // loop_pre_header
      _
    $region3: #{upsampling_bottleneck.14} parent=1 // loop_header
      %s9 = sphi 0, %s13
      %p10 = scmp.ge.s32.totalorder %s9, 6
      %s16 = sphi 0, %s28
      %s17 = sphi 0, %s24
      %s18 = sphi 0, %s16
      %s19 = sphi 0, %s17
      %s20 = sphi 0, %s18
      %s21 = sphi 0, %s19
      %s33 = sphi 0, %s35
      %s36 = sphi 0, %s33
      %s37 = sphi 0, %s36
      %s53 = sphi 0, %s37
      %s57 = sphi 0, %s57
      %s59 = sphi 0, %s57
      %s60 = sphi 0, %s59
      %s74 = sphi 0, %s60
      %s78 = sphi 0, %s78
      %s80 = sphi 0, %s78
      %s81 = sphi 0, %s80
      %s95 = sphi 0, %s81
      %s103 = sphi 0, %s105
      %s106 = sphi 0, %s103
      %s107 = sphi 0, %s106
      %s123 = sphi 0, %s107
    $region4: #{upsampling_bottleneck.14} parent=1 // loop_header_branch
      %12 = sbr.rel (%p10) target = $region8
    $region5: #{upsampling_bottleneck.14} parent=1 // loop_body
      %s14 = ssub.s32 %s9, 1
      %s15 = ssub.s32 %s9, 2
      %s22 = sadd.s32 1, %s17
      %p23 = scmp.ge.s32.totalorder %s22, 2
      %s24 = scalar_select %p23, 0, %s22
      %s25 = sadd.s32 1, %s16
      %s26 = scalar_select %p23, %s25, %s16
      %p27 = scmp.ge.s32.totalorder %s26, 2
      %s28 = scalar_select %p27, 0, %s26
      %s29 = ssub.s32 %s16, %s28
      %s30 = ssub.s32 %s17, %s24
      %s31 = sor.u32 %s29, %s30
      %p32 = scmp.eq.s32.totalorder %s31, 0
      %s34 = sadd.s32 %s33, 1
      %s35 = scalar_select %p32, %s33, %s34
      %p38 = pneg %p32
      %p39 = scmp.eq.s32.totalorder %s9, 3
      %p40 = por %p38, %p39
      %p41 = scmp.ne.s32.totalorder %s33, %s36
      %p42 = scmp.eq.s32.totalorder %s9, 0
      %p43 = por %p41, %p42
      %p44 = scmp.ne.s32.totalorder %s33, %s36
      %p45 = scmp.eq.s32.totalorder %s14, 3
      %p46 = por %p44, %p45
      %p47 = scmp.ne.s32.totalorder %s36, %s37
      %p48 = scmp.eq.s32.totalorder %s14, 0
      %p49 = por %p47, %p48
      %p50 = scmp.ne.s32.totalorder %s36, %s37
      %p51 = scmp.eq.s32.totalorder %s15, 3
      %p52 = por %p50, %p51
      %p54 = scmp.ne.s32.totalorder %s37, %s53
      %p55 = scmp.eq.s32.totalorder %s15, 0
      %p56 = por %p54, %p55
      %s58 = sadd.s32 %s57, 1
      %p61 = scmp.eq.s32.totalorder %s9, 3
      %p62 = scmp.ne.s32.totalorder %s57, %s59
      %p63 = scmp.eq.s32.totalorder %s9, 0
      %p64 = por %p62, %p63
      %p65 = scmp.ne.s32.totalorder %s57, %s59
      %p66 = scmp.eq.s32.totalorder %s14, 3
      %p67 = por %p65, %p66
      %p68 = scmp.ne.s32.totalorder %s59, %s60
      %p69 = scmp.eq.s32.totalorder %s14, 0
      %p70 = por %p68, %p69
      %p71 = scmp.ne.s32.totalorder %s59, %s60
      %p72 = scmp.eq.s32.totalorder %s15, 3
      %p73 = por %p71, %p72
      %p75 = scmp.ne.s32.totalorder %s60, %s74
      %p76 = scmp.eq.s32.totalorder %s15, 0
      %p77 = por %p75, %p76
      %s79 = sadd.s32 %s78, 1
      %p82 = scmp.eq.s32.totalorder %s9, 3
      %p83 = scmp.ne.s32.totalorder %s78, %s80
      %p84 = scmp.eq.s32.totalorder %s9, 0
      %p85 = por %p83, %p84
      %p86 = scmp.ne.s32.totalorder %s78, %s80
      %p87 = scmp.eq.s32.totalorder %s14, 3
      %p88 = por %p86, %p87
      %p89 = scmp.ne.s32.totalorder %s80, %s81
      %p90 = scmp.eq.s32.totalorder %s14, 0
      %p91 = por %p89, %p90
      %p92 = scmp.ne.s32.totalorder %s80, %s81
      %p93 = scmp.eq.s32.totalorder %s15, 3
      %p94 = por %p92, %p93
      %p96 = scmp.ne.s32.totalorder %s81, %s95
      %p97 = scmp.eq.s32.totalorder %s15, 0
      %p98 = por %p96, %p97
      %s99 = ssub.s32 %s16, %s28
      %s100 = ssub.s32 %s17, %s24
      %s101 = sor.u32 %s99, %s100
      %p102 = scmp.eq.s32.totalorder %s101, 0
      %s104 = sadd.s32 %s103, 1
      %s105 = scalar_select %p102, %s103, %s104
      %p108 = pneg %p102
      %p109 = scmp.eq.s32.totalorder %s9, 3
      %p110 = por %p108, %p109
      %p111 = scmp.ne.s32.totalorder %s103, %s106
      %p112 = scmp.eq.s32.totalorder %s9, 0
      %p113 = por %p111, %p112
      %p114 = scmp.ne.s32.totalorder %s103, %s106
      %p115 = scmp.eq.s32.totalorder %s14, 3
      %p116 = por %p114, %p115
      %p117 = scmp.ne.s32.totalorder %s106, %s107
      %p118 = scmp.eq.s32.totalorder %s14, 0
      %p119 = por %p117, %p118
      %p120 = scmp.ne.s32.totalorder %s106, %s107
      %p121 = scmp.eq.s32.totalorder %s15, 3
      %p122 = por %p120, %p121
      %p124 = scmp.ne.s32.totalorder %s107, %s123
      %p125 = scmp.eq.s32.totalorder %s15, 0
      %p126 = por %p124, %p125
      %p127 = scmp.le.s32.totalorder 1, %s9
      %p128 = scmp.lt.s32.totalorder %s9, 5
      %p129 = pnand %p127, %p128
      %p130 = pneg %p129
      // Predicated region
      $region9: #{upsampling_bottleneck.14} parent=5 // pred_check
        _
      $region10: #{upsampling_bottleneck.14} parent=5 // pred_check_branch
        %132 = sbr.rel (%p129) target = $region12
      $region11: #{upsampling_bottleneck.14} parent=5 // pred_region
        %s133 = ssub.s32 %s9, 1
        // Predicated region
        $region13: #{upsampling_bottleneck.14} parent=11 // pred_check
          %p134 = pneg %p70
        $region14: #{upsampling_bottleneck.14} parent=11 // pred_check_branch
          %136 = sbr.rel (%p134) target = $region16
        $region15: #{upsampling_bottleneck.14} parent=11 // pred_region
          _
        $region16: #{upsampling_bottleneck.14} parent=11 // pred_fallthru
          _
        // Predicated region
        $region17: #{upsampling_bottleneck.14} parent=11 // pred_check
          %p137 = pneg %p91
        $region18: #{upsampling_bottleneck.14} parent=11 // pred_check_branch
          %139 = sbr.rel (%p137) target = $region20
        $region19: #{upsampling_bottleneck.14} parent=11 // pred_region
          _
        $region20: #{upsampling_bottleneck.14} parent=11 // pred_fallthru
          _
      $region12: #{upsampling_bottleneck.14} parent=5 // pred_fallthru
        _
      %p140 = scmp.lt.s32.totalorder %s9, 4
      // Predicated region
      $region21: #{upsampling_bottleneck.14} parent=5 // pred_check
        %p141 = pneg %p140
      $region22: #{upsampling_bottleneck.14} parent=5 // pred_check_branch
        %143 = sbr.rel (%p141) target = $region24
      $region23: #{upsampling_bottleneck.14} parent=5 // pred_region
        // Predicated region
        $region25: #{upsampling_bottleneck.14} parent=23 // pred_check
          %p144 = pneg %p43
        $region26: #{upsampling_bottleneck.14} parent=23 // pred_check_branch
          %146 = sbr.rel (%p144) target = $region28
        $region27: #{upsampling_bottleneck.14} parent=23 // pred_region
          %s147 = sand.u32 %s33, 1
          %s148 = sand.u32 %s33, 1
          %s149 = smul.addr %s148, 80
          %s150 = scalar_lea.vmem [#allocation2], %s149
          %s151 = smul.u32 4, %s17
          %s152 = smul.addr %s16, 40
          %s153 = sadd.s32 %s151, %s152
          %s154 = smul.addr %s153, 4
          %s155 = scalar_lea.vmem %s0, %s154
          // Predicated region
          $region29: #{upsampling_bottleneck.14} parent=27 // pred_check
            _
          $region30: #{upsampling_bottleneck.14} parent=27 // pred_check_branch
            %157 = sbr.rel (0) target = $region32
          $region31: #{upsampling_bottleneck.14} parent=27 // pred_region
            // Predicated region
            $region33: #{upsampling_bottleneck.14} parent=31 // pred_check
              _
            $region34: #{upsampling_bottleneck.14} parent=31 // pred_check_branch
              %159 = sbr.rel (0) target = $region36
            $region35: #{upsampling_bottleneck.14} parent=31 // pred_region
              loop: start=0, step=1, limit=1
              $region37: #{upsampling_bottleneck.14} parent=35 // loop_pre_header
                _
              $region38: #{upsampling_bottleneck.14} parent=35 // loop_header
                %s161 = sphi 0, %s165
                %p162 = scmp.ge.s32.totalorder %s161, 1
                %s166 = sphi %s155, %s155
                %s167 = sphi %s150, %s150
              $region39: #{upsampling_bottleneck.14} parent=35 // loop_header_branch
                %164 = sbr.rel (%p162) target = $region43
              $region40: #{upsampling_bottleneck.14} parent=35 // loop_body
                %v168 = vld [vmem:[%s166] sm:$0xff]
                %169 = vst [vmem:[%s167] sm:$0xff] %v168
                %v170 = vld [vmem:[%s166 + $0x8] sm:$0xff]
                %171 = vst [vmem:[%s167 + $0x8] sm:$0xff] %v170
                %v172 = vld [vmem:[%s166 + $0x20] sm:$0xff]
                %173 = vst [vmem:[%s167 + $0x10] sm:$0xff] %v172
                %v174 = vld [vmem:[%s166 + $0x28] sm:$0xff]
                %175 = vst [vmem:[%s167 + $0x18] sm:$0xff] %v174
                %v176 = vld [vmem:[%s166 + $0x40] sm:$0xff]
                %177 = vst [vmem:[%s167 + $0x20] sm:$0xff] %v176
                %v178 = vld [vmem:[%s166 + $0x48] sm:$0xff]
                %179 = vst [vmem:[%s167 + $0x28] sm:$0xff] %v178
                %v180 = vld [vmem:[%s166 + $0x60] sm:$0xff]
                %181 = vst [vmem:[%s167 + $0x30] sm:$0xff] %v180
                %v182 = vld [vmem:[%s166 + $0x68] sm:$0xff]
                %183 = vst [vmem:[%s167 + $0x38] sm:$0xff] %v182
                %v184 = vld [vmem:[%s166 + $0x80] sm:$0xff]
                %185 = vst [vmem:[%s167 + $0x40] sm:$0xff] %v184
                %v186 = vld [vmem:[%s166 + $0x88] sm:$0xff]
                %187 = vst [vmem:[%s167 + $0x48] sm:$0xff] %v186
              $region41: #{upsampling_bottleneck.14} parent=35 // loop_footer
                %s165 = sadd.s32 1, %s161
              $region42: #{upsampling_bottleneck.14} parent=35 // loop_footer_branch
                %160 = sbr.rel target = $region38
              $region43: #{upsampling_bottleneck.14} parent=35 // loop_exit
                _
            $region36: #{upsampling_bottleneck.14} parent=31 // pred_fallthru
              _
            // Predicated region
            $region44: #{upsampling_bottleneck.14} parent=31 // pred_check
              _
            $region45: #{upsampling_bottleneck.14} parent=31 // pred_check_branch
              %189 = sbr.rel target = $region47
            $region46: #{upsampling_bottleneck.14} parent=31 // pred_region
              _
            $region47: #{upsampling_bottleneck.14} parent=31 // pred_fallthru
              _
          $region32: #{upsampling_bottleneck.14} parent=27 // pred_fallthru
            _
          %190 = vnop
        $region28: #{upsampling_bottleneck.14} parent=23 // pred_fallthru
          _
      $region24: #{upsampling_bottleneck.14} parent=5 // pred_fallthru
        _
      %p191 = scmp.le.s32.totalorder 1, %s9
      %p192 = scmp.lt.s32.totalorder %s9, 5
      %p193 = pnand %p191, %p192
      %p194 = pneg %p193
      // Predicated region
      $region48: #{upsampling_bottleneck.14} parent=5 // pred_check
        _
      $region49: #{upsampling_bottleneck.14} parent=5 // pred_check_branch
        %196 = sbr.rel (%p193) target = $region51
      $region50: #{upsampling_bottleneck.14} parent=5 // pred_region
        %s197 = ssub.s32 %s9, 1
        %s198 = sand.u32 %s36, 1
        %s199 = sand.u32 %s36, 1
        %s200 = smul.addr %s199, 80
        %s201 = scalar_lea.vmem [#allocation2], %s200
        // Predicated region
        $region52: #{upsampling_bottleneck.14} parent=50 // pred_check
          %p202 = pneg %p49
        $region53: #{upsampling_bottleneck.14} parent=50 // pred_check_branch
          %204 = sbr.rel (%p202) target = $region55
        $region54: #{upsampling_bottleneck.14} parent=50 // pred_region
          _
        $region55: #{upsampling_bottleneck.14} parent=50 // pred_fallthru
          _
        %s205 = sand.u32 %s36, 1
        %s206 = sand.u32 %s36, 1
        %s207 = smul.addr %s206, 80
        %s208 = scalar_lea.vmem [#allocation2], %s207
        %p209 = pneg %p49
        %p210 = pneg %p46
        %p211 = pneg %p70
        %p212 = pneg %p67
        %p213 = pneg %p91
        %p214 = pneg %p88
        %p215 = pneg %p119
        %p216 = pneg %p116
        %s217 = smul.u32 4, %s19
        %p218 = scmp.lt.s32.totalorder %s18, 1
        %s219 = scalar_select %p218, %s18, 1
        %p220 = scmp.lt.s32.totalorder %s217, 7
        %s221 = scalar_select %p220, %s217, 7
        %s222 = smul.addr %s219, 8
        %s223 = sadd.s32 %s221, %s222
        %s224 = smul.addr %s223, 8
        %s225 = scalar_lea.vmem %s3, %s224
        %s226 = smul.u32 4, %s19
        %s227 = smul.u32 4, %s19
        %p228 = scmp.lt.s32.totalorder %s18, 1
        %s229 = scalar_select %p228, %s18, 1
        %p230 = scmp.lt.s32.totalorder %s227, 7
        %s231 = scalar_select %p230, %s227, 7
        %s232 = smul.addr %s229, 8
        %s233 = sadd.s32 %s231, %s232
        %s234 = smul.addr %s233, 8
        %s235 = scalar_lea.vmem %s3, %s234
        %s236 = smul.u32 4, %s19
        %v238 = vld [vmem:[%s1] sm:$0xf]
        %v239 = vld [vmem:[%s201] sm:$0xff]
        %v240 = vld [vmem:[%s201 + $0x8] sm:$0xff]
        %v241 = vld [vmem:[%s201 + $0x10] sm:$0xff]
        %v242 = vld [vmem:[%s201 + $0x18] sm:$0xff]
        %v243 = vld [vmem:[%s201 + $0x20] sm:$0xff]
        %v244 = vld [vmem:[%s201 + $0x28] sm:$0xff]
        %v245 = vld [vmem:[%s201 + $0x30] sm:$0xff]
        %v246 = vld [vmem:[%s201 + $0x38] sm:$0xff]
        %v247 = vld [vmem:[%s201 + $0x40] sm:$0x33]
        %v248 = vld [vmem:[%s201 + $0x48] sm:$0x33]
        %v249 = vld [vmem:[%s2] sm:$0xff]
        %251 = vset.pattern.permute.xlu0 0
        %252 = vperm.xlu0 %251, %v249
        %v253 = vpop.permute.xlu0 %252
        %v265 = vunpack.c.l.b16 %v239
        %v266 = vunpack.c.h.b16 %v239
        %v267 = vunpack.c.l.b16 %v240
        %v268 = vunpack.c.h.b16 %v240
        %v269 = vunpack.c.l.b16 %v241
        %v270 = vunpack.c.h.b16 %v241
        %v271 = vunpack.c.l.b16 %v242
        %v272 = vunpack.c.h.b16 %v242
        %v273 = vunpack.c.l.b16 %v243
        %v274 = vunpack.c.h.b16 %v243
        %v275 = vunpack.c.l.b16 %v244
        %v276 = vunpack.c.h.b16 %v244
        %v277 = vunpack.c.l.b16 %v245
        %v278 = vunpack.c.h.b16 %v245
        %v279 = vunpack.c.l.b16 %v246
        %v280 = vunpack.c.h.b16 %v246
        %v281 = vunpack.c.l.b16 %v247
        %v282 = vunpack.c.h.b16 %v247
        %v283 = vunpack.c.l.b16 %v248
        %v284 = vunpack.c.h.b16 %v248
        %v285 = vpack.c.b16 %v269, %v265
        %v286 = vpack.c.b16 %v270, %v266
        %v287 = vpack.c.b16 %v271, %v267
        %v288 = vpack.c.b16 %v272, %v268
        %v289 = vpack.c.b16 %v277, %v273
        %v290 = vpack.c.b16 %v278, %v274
        %v291 = vpack.c.b16 %v279, %v275
        %v292 = vpack.c.b16 %v280, %v276
        %v293 = vpack.c.b16 %v281, %v281
        %v294 = vpack.c.b16 %v282, %v282
        %v295 = vpack.c.b16 %v283, %v283
        %v296 = vpack.c.b16 %v284, %v284
        %vm305 = vcmask 293888
        %v307 = vsel %vm305, %v238, 0
        %vm309 = vcmask 1041408
        %v311 = vsel %vm309, %v293, 0
        %v314 = vsel %vm309, %v294, 0
        %v317 = vsel %vm309, %v295, 0
        %v320 = vsel %vm309, %v296, 0
        %322 = vmatpush.bf16.msra.mxu0 0
        %323 = vmatpush.bf16.msra.mxu0 0
        %324 = vmatpush.bf16.msra.mxu0 0
        %325 = vmatpush.bf16.msra.mxu0 0
        %326 = vmatpush.bf16.msra.mxu0 0
        %327 = vmatpush.bf16.msra.mxu0 %v311
        %328 = vmatpush.bf16.msra.mxu0 %v289
        %329 = vmatpush.bf16.msra.mxu0 %v285
        %330 = vmatmul.bf16.gmra.mxu0 %v307
        %v331 = vpop.f32.mrf.mxu0
        %v332 = vadd.f32 %v253, %v331
        %v333 = vpop.f32.mrf.mxu0
        %334 = vdwg.mxu0
        %335 = vmatpush.bf16.msra.mxu0 0
        %336 = vmatpush.bf16.msra.mxu0 0
        %337 = vmatpush.bf16.msra.mxu0 0
        %338 = vmatpush.bf16.msra.mxu0 0
        %339 = vmatpush.bf16.msra.mxu0 0
        %340 = vmatpush.bf16.msra.mxu0 %v314
        %341 = vmatpush.bf16.msra.mxu0 %v290
        %342 = vmatpush.bf16.msra.mxu0 %v286
        %343 = vmatmul.bf16.gmra.mxu0 %v307
        %v344 = vpop.f32.mrf.mxu0
        %v345 = vadd.f32 %v253, %v344
        %v346 = vpop.f32.mrf.mxu0
        %347 = vdwg.mxu0
        %348 = vmatpush.bf16.msra.mxu0 0
        %349 = vmatpush.bf16.msra.mxu0 0
        %350 = vmatpush.bf16.msra.mxu0 0
        %351 = vmatpush.bf16.msra.mxu0 0
        %352 = vmatpush.bf16.msra.mxu0 0
        %353 = vmatpush.bf16.msra.mxu0 %v317
        %354 = vmatpush.bf16.msra.mxu0 %v291
        %355 = vmatpush.bf16.msra.mxu0 %v287
        %356 = vmatmul.bf16.gmra.mxu0 %v307
        %v357 = vpop.f32.mrf.mxu0
        %v358 = vadd.f32 %v253, %v357
        %v359 = vpop.f32.mrf.mxu0
        %360 = vdwg.mxu0
        %361 = vmatpush.bf16.msra.mxu0 0
        %362 = vmatpush.bf16.msra.mxu0 0
        %363 = vmatpush.bf16.msra.mxu0 0
        %364 = vmatpush.bf16.msra.mxu0 0
        %365 = vmatpush.bf16.msra.mxu0 0
        %366 = vmatpush.bf16.msra.mxu0 %v320
        %367 = vmatpush.bf16.msra.mxu0 %v292
        %368 = vmatpush.bf16.msra.mxu0 %v288
        %369 = vmatmul.bf16.gmra.mxu0 %v307
        %v370 = vpop.f32.mrf.mxu0
        %v371 = vadd.f32 %v253, %v370
        %v372 = vpop.f32.mrf.mxu0
        %373 = vdwg.mxu0
        %v374 = vmax.f32 %v332, 0.0
        %v375 = vmax.f32 %v345, 0.0
        %v376 = vmax.f32 %v358, 0.0
        %v377 = vmax.f32 %v371, 0.0
        %378 = vst [vmem:[%s235] sm:$0xff] %v374
        %379 = vst [vmem:[%s235 + $0x8] sm:$0xff] %v375
        %380 = vst [vmem:[%s235 + $0x10] sm:$0xff] %v376
        %381 = vst [vmem:[%s235 + $0x18] sm:$0xff] %v377
        %s382 = smul.u32 4, %s19
        %p383 = scmp.lt.s32.totalorder %s18, 1
        %s384 = scalar_select %p383, %s18, 1
        %p385 = scmp.lt.s32.totalorder %s382, 7
        %s386 = scalar_select %p385, %s382, 7
        %s387 = smul.addr %s384, 8
        %s388 = sadd.s32 %s386, %s387
        %s389 = smul.addr %s388, 8
        %s390 = scalar_lea.vmem %s3, %s389
        // Predicated region
        $region56: #{upsampling_bottleneck.14} parent=50 // pred_check
          %p391 = pneg %p116
        $region57: #{upsampling_bottleneck.14} parent=50 // pred_check_branch
          %393 = sbr.rel (%p391) target = $region59
        $region58: #{upsampling_bottleneck.14} parent=50 // pred_region
          %s394 = smul.u32 4, %s19
        $region59: #{upsampling_bottleneck.14} parent=50 // pred_fallthru
          _
      $region51: #{upsampling_bottleneck.14} parent=5 // pred_fallthru
        _
      %p395 = scmp.le.s32.totalorder 2, %s9
      // Predicated region
      $region60: #{upsampling_bottleneck.14} parent=5 // pred_check
        %p396 = pneg %p395
      $region61: #{upsampling_bottleneck.14} parent=5 // pred_check_branch
        %398 = sbr.rel (%p396) target = $region63
      $region62: #{upsampling_bottleneck.14} parent=5 // pred_region
        %s399 = ssub.s32 %s9, 2
        // Predicated region
        $region64: #{upsampling_bottleneck.14} parent=62 // pred_check
          %p400 = pneg %p122
        $region65: #{upsampling_bottleneck.14} parent=62 // pred_check_branch
          %402 = sbr.rel (%p400) target = $region67
        $region66: #{upsampling_bottleneck.14} parent=62 // pred_region
          %s403 = smul.u32 4, %s21
          %p404 = scmp.lt.s32.totalorder %s20, 1
          %s405 = scalar_select %p404, %s20, 1
          %p406 = scmp.lt.s32.totalorder %s403, 7
          %s407 = scalar_select %p406, %s403, 7
          %s408 = smul.addr %s405, 8
          %s409 = sadd.s32 %s407, %s408
          %s410 = smul.addr %s409, 8
          %s411 = scalar_lea.vmem %s3, %s410
        $region67: #{upsampling_bottleneck.14} parent=62 // pred_fallthru
          _
      $region63: #{upsampling_bottleneck.14} parent=5 // pred_fallthru
        _
    $region6: #{upsampling_bottleneck.14} parent=1 // loop_footer
      %s13 = sadd.s32 1, %s9
    $region7: #{upsampling_bottleneck.14} parent=1 // loop_footer_branch
      %8 = sbr.rel target = $region3
    $region8: #{upsampling_bottleneck.14} parent=1 // loop_exit
      _

// kernel: upsampling_bottleneck.8
$region0: #{upsampling_bottleneck.8}
  #allocation0 [shape = 'u32[]', space=smem, size = 0x4, offset = 0x4, fixed_abs, tag = 'smem constant byte address 0x4 - core index']
  #allocation1 [shape = 'u32[72,128]{1,0:T(1,128)}', space=vmem, size = 0x9000, scoped, tag = 'internal scratch']
  %s0 = inlined_call_operand.vmem [shape: bf16[2,16,256], index: 0, kind: input, shape index: {}]
  %s1 = inlined_call_operand.vmem [shape: bf16[8,16], index: 1, kind: input, shape index: {}]
  %s2 = inlined_call_operand.vmem [shape: f32[8,1], index: 2, kind: input, shape index: {}]
  %s3 = inlined_call_operand.vmem [shape: f32[2,8,256], index: 3, kind: output, shape index: {}]
  %s4 = sld [smem:[#allocation0]]
  $region45: #{upsampling_bottleneck.8} parent=0
    _
  %s6 = ssub.s32 1, %s4
  %s7 = scalar_select 0, %s6, %s4
  loop: start=0, step=1, limit=4
  $region2: #{upsampling_bottleneck.8} parent=0 // loop_pre_header
    _
  $region3: #{upsampling_bottleneck.8} parent=0 // loop_header
    %s9 = sphi 0, %s13
    %p10 = scmp.ge.s32.totalorder %s9, 4
    %s16 = sphi 0, %s28
    %s17 = sphi 0, %s24
    %s18 = sphi 0, %s16
    %s19 = sphi 0, %s17
    %s20 = sphi 0, %s18
    %s21 = sphi 0, %s19
    %s33 = sphi 0, %s35
    %s36 = sphi 0, %s33
    %s37 = sphi 0, %s36
    %s53 = sphi 0, %s37
    %s57 = sphi 0, %s57
    %s59 = sphi 0, %s57
    %s60 = sphi 0, %s59
    %s74 = sphi 0, %s60
    %s78 = sphi 0, %s78
    %s80 = sphi 0, %s78
    %s81 = sphi 0, %s80
    %s95 = sphi 0, %s81
    %s103 = sphi 0, %s105
    %s106 = sphi 0, %s103
    %s107 = sphi 0, %s106
    %s123 = sphi 0, %s107
  $region4: #{upsampling_bottleneck.8} parent=0 // loop_header_branch
    %12 = sbr.rel (%p10) target = $region8
  $region5: #{upsampling_bottleneck.8} parent=0 // loop_body
    %s14 = ssub.s32 %s9, 1
    %s15 = ssub.s32 %s9, 2
    %s22 = sadd.s32 1, %s17
    %p23 = scmp.ge.s32.totalorder %s22, 1
    %s24 = scalar_select %p23, 0, %s22
    %s25 = sadd.s32 1, %s16
    %s26 = scalar_select %p23, %s25, %s16
    %p27 = scmp.ge.s32.totalorder %s26, 2
    %s28 = scalar_select %p27, 0, %s26
    %s29 = ssub.s32 %s16, %s28
    %s30 = ssub.s32 %s17, %s24
    %s31 = sor.u32 %s29, %s30
    %p32 = scmp.eq.s32.totalorder %s31, 0
    %s34 = sadd.s32 %s33, 1
    %s35 = scalar_select %p32, %s33, %s34
    %p38 = pneg %p32
    %p39 = scmp.eq.s32.totalorder %s9, 1
    %p40 = por %p38, %p39
    %p41 = scmp.ne.s32.totalorder %s33, %s36
    %p42 = scmp.eq.s32.totalorder %s9, 0
    %p43 = por %p41, %p42
    %p44 = scmp.ne.s32.totalorder %s33, %s36
    %p45 = scmp.eq.s32.totalorder %s14, 1
    %p46 = por %p44, %p45
    %p47 = scmp.ne.s32.totalorder %s36, %s37
    %p48 = scmp.eq.s32.totalorder %s14, 0
    %p49 = por %p47, %p48
    %p50 = scmp.ne.s32.totalorder %s36, %s37
    %p51 = scmp.eq.s32.totalorder %s15, 1
    %p52 = por %p50, %p51
    %p54 = scmp.ne.s32.totalorder %s37, %s53
    %p55 = scmp.eq.s32.totalorder %s15, 0
    %p56 = por %p54, %p55
    %s58 = sadd.s32 %s57, 1
    %p61 = scmp.eq.s32.totalorder %s9, 1
    %p62 = scmp.ne.s32.totalorder %s57, %s59
    %p63 = scmp.eq.s32.totalorder %s9, 0
    %p64 = por %p62, %p63
    %p65 = scmp.ne.s32.totalorder %s57, %s59
    %p66 = scmp.eq.s32.totalorder %s14, 1
    %p67 = por %p65, %p66
    %p68 = scmp.ne.s32.totalorder %s59, %s60
    %p69 = scmp.eq.s32.totalorder %s14, 0
    %p70 = por %p68, %p69
    %p71 = scmp.ne.s32.totalorder %s59, %s60
    %p72 = scmp.eq.s32.totalorder %s15, 1
    %p73 = por %p71, %p72
    %p75 = scmp.ne.s32.totalorder %s60, %s74
    %p76 = scmp.eq.s32.totalorder %s15, 0
    %p77 = por %p75, %p76
    %s79 = sadd.s32 %s78, 1
    %p82 = scmp.eq.s32.totalorder %s9, 1
    %p83 = scmp.ne.s32.totalorder %s78, %s80
    %p84 = scmp.eq.s32.totalorder %s9, 0
    %p85 = por %p83, %p84
    %p86 = scmp.ne.s32.totalorder %s78, %s80
    %p87 = scmp.eq.s32.totalorder %s14, 1
    %p88 = por %p86, %p87
    %p89 = scmp.ne.s32.totalorder %s80, %s81
    %p90 = scmp.eq.s32.totalorder %s14, 0
    %p91 = por %p89, %p90
    %p92 = scmp.ne.s32.totalorder %s80, %s81
    %p93 = scmp.eq.s32.totalorder %s15, 1
    %p94 = por %p92, %p93
    %p96 = scmp.ne.s32.totalorder %s81, %s95
    %p97 = scmp.eq.s32.totalorder %s15, 0
    %p98 = por %p96, %p97
    %s99 = ssub.s32 %s16, %s28
    %s100 = ssub.s32 %s17, %s24
    %s101 = sor.u32 %s99, %s100
    %p102 = scmp.eq.s32.totalorder %s101, 0
    %s104 = sadd.s32 %s103, 1
    %s105 = scalar_select %p102, %s103, %s104
    %p108 = pneg %p102
    %p109 = scmp.eq.s32.totalorder %s9, 1
    %p110 = por %p108, %p109
    %p111 = scmp.ne.s32.totalorder %s103, %s106
    %p112 = scmp.eq.s32.totalorder %s9, 0
    %p113 = por %p111, %p112
    %p114 = scmp.ne.s32.totalorder %s103, %s106
    %p115 = scmp.eq.s32.totalorder %s14, 1
    %p116 = por %p114, %p115
    %p117 = scmp.ne.s32.totalorder %s106, %s107
    %p118 = scmp.eq.s32.totalorder %s14, 0
    %p119 = por %p117, %p118
    %p120 = scmp.ne.s32.totalorder %s106, %s107
    %p121 = scmp.eq.s32.totalorder %s15, 1
    %p122 = por %p120, %p121
    %p124 = scmp.ne.s32.totalorder %s107, %s123
    %p125 = scmp.eq.s32.totalorder %s15, 0
    %p126 = por %p124, %p125
    %p127 = scmp.le.s32.totalorder 1, %s9
    %p128 = scmp.lt.s32.totalorder %s9, 3
    %p129 = pnand %p127, %p128
    %p130 = pneg %p129
    // Predicated region
    $region9: #{upsampling_bottleneck.8} parent=5 // pred_check
      _
    $region10: #{upsampling_bottleneck.8} parent=5 // pred_check_branch
      %132 = sbr.rel (%p129) target = $region12
    $region11: #{upsampling_bottleneck.8} parent=5 // pred_region
      %s133 = ssub.s32 %s9, 1
      // Predicated region
      $region13: #{upsampling_bottleneck.8} parent=11 // pred_check
        %p134 = pneg %p70
      $region14: #{upsampling_bottleneck.8} parent=11 // pred_check_branch
        %136 = sbr.rel (%p134) target = $region16
      $region15: #{upsampling_bottleneck.8} parent=11 // pred_region
        _
      $region16: #{upsampling_bottleneck.8} parent=11 // pred_fallthru
        _
      // Predicated region
      $region17: #{upsampling_bottleneck.8} parent=11 // pred_check
        %p137 = pneg %p91
      $region18: #{upsampling_bottleneck.8} parent=11 // pred_check_branch
        %139 = sbr.rel (%p137) target = $region20
      $region19: #{upsampling_bottleneck.8} parent=11 // pred_region
        _
      $region20: #{upsampling_bottleneck.8} parent=11 // pred_fallthru
        _
    $region12: #{upsampling_bottleneck.8} parent=5 // pred_fallthru
      _
    %p140 = scmp.lt.s32.totalorder %s9, 2
    // Predicated region
    $region21: #{upsampling_bottleneck.8} parent=5 // pred_check
      %p141 = pneg %p140
    $region22: #{upsampling_bottleneck.8} parent=5 // pred_check_branch
      %143 = sbr.rel (%p141) target = $region24
    $region23: #{upsampling_bottleneck.8} parent=5 // pred_region
      // Predicated region
      $region25: #{upsampling_bottleneck.8} parent=23 // pred_check
        %p144 = pneg %p43
      $region26: #{upsampling_bottleneck.8} parent=23 // pred_check_branch
        %146 = sbr.rel (%p144) target = $region28
      $region27: #{upsampling_bottleneck.8} parent=23 // pred_region
        %s147 = smul.u32 2, %s17
        %p148 = scmp.lt.s32.totalorder %s16, 1
        %s149 = scalar_select %p148, %s16, 1
        %p150 = scmp.lt.s32.totalorder %s147, 1
        %s151 = scalar_select %p150, %s147, 1
        %s152 = smul.addr %s149, 4
        %s153 = sadd.s32 %s151, %s152
        %s154 = smul.addr %s153, 4
        %s155 = scalar_lea.vmem %s0, %s154
        %s156 = smul.u32 2, %s17
      $region28: #{upsampling_bottleneck.8} parent=23 // pred_fallthru
        _
    $region24: #{upsampling_bottleneck.8} parent=5 // pred_fallthru
      _
    %p157 = scmp.le.s32.totalorder 1, %s9
    %p158 = scmp.lt.s32.totalorder %s9, 3
    %p159 = pnand %p157, %p158
    %p160 = pneg %p159
    // Predicated region
    $region29: #{upsampling_bottleneck.8} parent=5 // pred_check
      _
    $region30: #{upsampling_bottleneck.8} parent=5 // pred_check_branch
      %162 = sbr.rel (%p159) target = $region32
    $region31: #{upsampling_bottleneck.8} parent=5 // pred_region
      %s163 = ssub.s32 %s9, 1
      %s164 = smul.u32 2, %s19
      %p165 = scmp.lt.s32.totalorder %s18, 1
      %s166 = scalar_select %p165, %s18, 1
      %p167 = scmp.lt.s32.totalorder %s164, 1
      %s168 = scalar_select %p167, %s164, 1
      %s169 = smul.addr %s166, 4
      %s170 = sadd.s32 %s168, %s169
      %s171 = smul.addr %s170, 4
      %s172 = scalar_lea.vmem %s0, %s171
      %p173 = pneg %p49
      %p174 = pneg %p46
      %p175 = pneg %p70
      %p176 = pneg %p67
      %p177 = pneg %p91
      %p178 = pneg %p88
      %p179 = pneg %p119
      %p180 = pneg %p116
      %s181 = smul.u32 2, %s19
      %p182 = scmp.lt.s32.totalorder %s18, 1
      %s183 = scalar_select %p182, %s18, 1
      %p184 = scmp.lt.s32.totalorder %s181, 1
      %s185 = scalar_select %p184, %s181, 1
      %s186 = smul.addr %s183, 2
      %s187 = sadd.s32 %s185, %s186
      %s188 = smul.addr %s187, 8
      %s189 = scalar_lea.vmem %s3, %s188
      %s190 = smul.u32 2, %s19
      %p191 = scmp.lt.s32.totalorder %s18, 1
      %s192 = scalar_select %p191, %s18, 1
      %p193 = scmp.lt.s32.totalorder %s190, 1
      %s194 = scalar_select %p193, %s190, 1
      %s195 = smul.addr %s192, 4
      %s196 = sadd.s32 %s194, %s195
      %s197 = smul.addr %s196, 4
      %s198 = scalar_lea.vmem %s0, %s197
      %s199 = smul.u32 2, %s19
      %s200 = smul.u32 2, %s19
      %p201 = scmp.lt.s32.totalorder %s18, 1
      %s202 = scalar_select %p201, %s18, 1
      %p203 = scmp.lt.s32.totalorder %s200, 1
      %s204 = scalar_select %p203, %s200, 1
      %s205 = smul.addr %s202, 2
      %s206 = sadd.s32 %s204, %s205
      %s207 = smul.addr %s206, 8
      %s208 = scalar_lea.vmem %s3, %s207
      %s209 = smul.u32 2, %s19
      %v211 = vld [vmem:[%s1] sm:$0xf]
      %v212 = vld [vmem:[%s198] sm:$0xff]
      %v213 = vld [vmem:[%s198 + $0x8] sm:$0xff]
      %v214 = vld [vmem:[%s2] sm:$0xff]
      %216 = vset.pattern.permute.xlu0 0
      %217 = vperm.xlu0 %216, %v214
      %v218 = vpop.permute.xlu0 %217
      %v222 = vunpack.c.l.b16 %v212
      %v223 = vunpack.c.h.b16 %v212
      %v224 = vunpack.c.l.b16 %v213
      %v225 = vunpack.c.h.b16 %v213
      %v226 = vpack.c.b16 %v224, %v222
      %v227 = vpack.c.b16 %v225, %v223
      %vm230 = vcmask 130048
      %v232 = vsel %vm230, %v211, 0
      %234 = vmatpush.bf16.msra.mxu0 0
      %235 = vmatpush.bf16.msra.mxu0 0
      %236 = vmatpush.bf16.msra.mxu0 0
      %237 = vmatpush.bf16.msra.mxu0 0
      %238 = vmatpush.bf16.msra.mxu0 0
      %239 = vmatpush.bf16.msra.mxu0 0
      %240 = vmatpush.bf16.msra.mxu0 0
      %241 = vmatpush.bf16.msra.mxu0 %v226
      %242 = vmatmul.bf16.gmra.mxu0 %v232
      %v243 = vpop.f32.mrf.mxu0
      %v244 = vadd.f32 %v218, %v243
      %v245 = vpop.f32.mrf.mxu0
      %246 = vdwg.mxu0
      %247 = vmatpush.bf16.msra.mxu0 0
      %248 = vmatpush.bf16.msra.mxu0 0
      %249 = vmatpush.bf16.msra.mxu0 0
      %250 = vmatpush.bf16.msra.mxu0 0
      %251 = vmatpush.bf16.msra.mxu0 0
      %252 = vmatpush.bf16.msra.mxu0 0
      %253 = vmatpush.bf16.msra.mxu0 0
      %254 = vmatpush.bf16.msra.mxu0 %v227
      %255 = vmatmul.bf16.gmra.mxu0 %v232
      %v256 = vpop.f32.mrf.mxu0
      %v257 = vadd.f32 %v218, %v256
      %v258 = vpop.f32.mrf.mxu0
      %259 = vdwg.mxu0
      %v260 = vmax.f32 %v244, 0.0
      %v261 = vmax.f32 %v257, 0.0
      %262 = vst [vmem:[%s208] sm:$0xff] %v260
      %263 = vst [vmem:[%s208 + $0x8] sm:$0xff] %v261
      %s264 = smul.u32 2, %s19
      %p265 = scmp.lt.s32.totalorder %s18, 1
      %s266 = scalar_select %p265, %s18, 1
      %p267 = scmp.lt.s32.totalorder %s264, 1
      %s268 = scalar_select %p267, %s264, 1
      %s269 = smul.addr %s266, 2
      %s270 = sadd.s32 %s268, %s269
      %s271 = smul.addr %s270, 8
      %s272 = scalar_lea.vmem %s3, %s271
      // Predicated region
      $region33: #{upsampling_bottleneck.8} parent=31 // pred_check
        %p273 = pneg %p116
      $region34: #{upsampling_bottleneck.8} parent=31 // pred_check_branch
        %275 = sbr.rel (%p273) target = $region36
      $region35: #{upsampling_bottleneck.8} parent=31 // pred_region
        %s276 = smul.u32 2, %s19
      $region36: #{upsampling_bottleneck.8} parent=31 // pred_fallthru
        _
    $region32: #{upsampling_bottleneck.8} parent=5 // pred_fallthru
      _
    %p277 = scmp.le.s32.totalorder 2, %s9
    // Predicated region
    $region37: #{upsampling_bottleneck.8} parent=5 // pred_check
      %p278 = pneg %p277
    $region38: #{upsampling_bottleneck.8} parent=5 // pred_check_branch
      %280 = sbr.rel (%p278) target = $region40
    $region39: #{upsampling_bottleneck.8} parent=5 // pred_region
      %s281 = ssub.s32 %s9, 2
      // Predicated region
      $region41: #{upsampling_bottleneck.8} parent=39 // pred_check
        %p282 = pneg %p122
      $region42: #{upsampling_bottleneck.8} parent=39 // pred_check_branch
        %284 = sbr.rel (%p282) target = $region44
      $region43: #{upsampling_bottleneck.8} parent=39 // pred_region
        %s285 = smul.u32 2, %s21
        %p286 = scmp.lt.s32.totalorder %s20, 1
        %s287 = scalar_select %p286, %s20, 1
        %p288 = scmp.lt.s32.totalorder %s285, 1
        %s289 = scalar_select %p288, %s285, 1
        %s290 = smul.addr %s287, 2
        %s291 = sadd.s32 %s289, %s290
        %s292 = smul.addr %s291, 8
        %s293 = scalar_lea.vmem %s3, %s292
      $region44: #{upsampling_bottleneck.8} parent=39 // pred_fallthru
        _
    $region40: #{upsampling_bottleneck.8} parent=5 // pred_fallthru
      _
  $region6: #{upsampling_bottleneck.8} parent=0 // loop_footer
    %s13 = sadd.s32 1, %s9
  $region7: #{upsampling_bottleneck.8} parent=0 // loop_footer_branch
    %8 = sbr.rel target = $region3
  $region8: #{upsampling_bottleneck.8} parent=0 // loop_exit
    _

// kernel: upsampling_bottleneck.15
$region0: #{upsampling_bottleneck.15}
  #allocation0 [shape = 'u32[]', space=smem, size = 0x4, offset = 0x4, fixed_abs, tag = 'smem constant byte address 0x4 - core index']
  #allocation1 [shape = 'u32[72,128]{1,0:T(1,128)}', space=vmem, size = 0x9000, scoped, tag = 'internal scratch']
  %s0 = inlined_call_operand.vmem [shape: f32[16,1024], index: 0, kind: input, shape index: {}]
  %s1 = inlined_call_operand.vmem [shape: s32[16,1024], index: 1, kind: input, shape index: {}]
  %s2 = inlined_call_operand.vmem [shape: f32[16,1024], index: 2, kind: input, shape index: {}]
  %s3 = inlined_call_operand.vmem [shape: f32[16,1024], index: 3, kind: output, shape index: {}]
  %s4 = sld [smem:[#allocation0]]
  $region22: #{upsampling_bottleneck.15} parent=0
    _
  %s6 = ssub.s32 1, %s4
  %s7 = scalar_select 0, %s6, %s4
  // Predicated region
  $region2: #{upsampling_bottleneck.15} parent=0 // pred_check
    _
  $region3: #{upsampling_bottleneck.15} parent=0 // pred_check_branch
    %9 = sbr.rel (0) target = $region5
  $region4: #{upsampling_bottleneck.15} parent=0 // pred_region
    _
  $region5: #{upsampling_bottleneck.15} parent=0 // pred_fallthru
    _
  // Predicated region
  $region6: #{upsampling_bottleneck.15} parent=0 // pred_check
    _
  $region7: #{upsampling_bottleneck.15} parent=0 // pred_check_branch
    %11 = sbr.rel (0) target = $region9
  $region8: #{upsampling_bottleneck.15} parent=0 // pred_region
    _
  $region9: #{upsampling_bottleneck.15} parent=0 // pred_fallthru
    _
  // Predicated region
  $region10: #{upsampling_bottleneck.15} parent=0 // pred_check
    _
  $region11: #{upsampling_bottleneck.15} parent=0 // pred_check_branch
    %13 = sbr.rel (0) target = $region13
  $region12: #{upsampling_bottleneck.15} parent=0 // pred_region
    _
  $region13: #{upsampling_bottleneck.15} parent=0 // pred_fallthru
    _
  %v14 = vlaneseq
  %v15 = vand.u32 %v14, 127
  %v16 = vadd.s32 %v15, 128
  %v17 = vadd.s32 %v15, 256
  %v18 = vadd.s32 %v15, 384
  %v19 = vadd.s32 %v15, 512
  %v20 = vadd.s32 %v15, 640
  %v21 = vadd.s32 %v15, 768
  %v22 = vadd.s32 %v15, 896
  %s23 = smul.u32 0, 1024
  %v24 = vstv %s23
  %v25 = vadd.s32 %v15, %v24
  %v26 = vadd.s32 %v16, %v24
  %v27 = vadd.s32 %v17, %v24
  %v28 = vadd.s32 %v18, %v24
  %v29 = vadd.s32 %v19, %v24
  %v30 = vadd.s32 %v20, %v24
  %v31 = vadd.s32 %v21, %v24
  %v32 = vadd.s32 %v22, %v24
  %v33 = vld [vmem:[%s1] sm:$0xff]
  %v34 = vld [vmem:[%s1 + $0x8] sm:$0xff]
  %v35 = vld [vmem:[%s1 + $0x10] sm:$0xff]
  %v36 = vld [vmem:[%s1 + $0x18] sm:$0xff]
  %v37 = vld [vmem:[%s1 + $0x20] sm:$0xff]
  %v38 = vld [vmem:[%s1 + $0x28] sm:$0xff]
  %v39 = vld [vmem:[%s1 + $0x30] sm:$0xff]
  %v40 = vld [vmem:[%s1 + $0x38] sm:$0xff]
  %v41 = vld [vmem:[%s1 + $0x40] sm:$0xff]
  %v42 = vld [vmem:[%s1 + $0x48] sm:$0xff]
  %v43 = vld [vmem:[%s1 + $0x50] sm:$0xff]
  %v44 = vld [vmem:[%s1 + $0x58] sm:$0xff]
  %v45 = vld [vmem:[%s1 + $0x60] sm:$0xff]
  %v46 = vld [vmem:[%s1 + $0x68] sm:$0xff]
  %v47 = vld [vmem:[%s1 + $0x70] sm:$0xff]
  %v48 = vld [vmem:[%s1 + $0x78] sm:$0xff]
  %vm49 = vcmp.eq.s32.totalorder %v33, %v25
  %vm50 = vcmp.eq.s32.totalorder %v34, %v26
  %vm51 = vcmp.eq.s32.totalorder %v35, %v27
  %vm52 = vcmp.eq.s32.totalorder %v36, %v28
  %vm53 = vcmp.eq.s32.totalorder %v37, %v29
  %vm54 = vcmp.eq.s32.totalorder %v38, %v30
  %vm55 = vcmp.eq.s32.totalorder %v39, %v31
  %vm56 = vcmp.eq.s32.totalorder %v40, %v32
  %vm57 = vcmp.eq.s32.totalorder %v41, %v25
  %vm58 = vcmp.eq.s32.totalorder %v42, %v26
  %vm59 = vcmp.eq.s32.totalorder %v43, %v27
  %vm60 = vcmp.eq.s32.totalorder %v44, %v28
  %vm61 = vcmp.eq.s32.totalorder %v45, %v29
  %vm62 = vcmp.eq.s32.totalorder %v46, %v30
  %vm63 = vcmp.eq.s32.totalorder %v47, %v31
  %vm64 = vcmp.eq.s32.totalorder %v48, %v32
  %v65 = vld [vmem:[%s0] sm:$0xff]
  %v66 = vld [vmem:[%s0 + $0x8] sm:$0xff]
  %v67 = vld [vmem:[%s0 + $0x10] sm:$0xff]
  %v68 = vld [vmem:[%s0 + $0x18] sm:$0xff]
  %v69 = vld [vmem:[%s0 + $0x20] sm:$0xff]
  %v70 = vld [vmem:[%s0 + $0x28] sm:$0xff]
  %v71 = vld [vmem:[%s0 + $0x30] sm:$0xff]
  %v72 = vld [vmem:[%s0 + $0x38] sm:$0xff]
  %v73 = vld [vmem:[%s0 + $0x40] sm:$0xff]
  %v74 = vld [vmem:[%s0 + $0x48] sm:$0xff]
  %v75 = vld [vmem:[%s0 + $0x50] sm:$0xff]
  %v76 = vld [vmem:[%s0 + $0x58] sm:$0xff]
  %v77 = vld [vmem:[%s0 + $0x60] sm:$0xff]
  %v78 = vld [vmem:[%s0 + $0x68] sm:$0xff]
  %v79 = vld [vmem:[%s0 + $0x70] sm:$0xff]
  %v80 = vld [vmem:[%s0 + $0x78] sm:$0xff]
  %v81 = vsel %vm49, %v65, 0.0
  %v82 = vsel %vm50, %v66, 0.0
  %v83 = vsel %vm51, %v67, 0.0
  %v84 = vsel %vm52, %v68, 0.0
  %v85 = vsel %vm53, %v69, 0.0
  %v86 = vsel %vm54, %v70, 0.0
  %v87 = vsel %vm55, %v71, 0.0
  %v88 = vsel %vm56, %v72, 0.0
  %v89 = vsel %vm57, %v73, 0.0
  %v90 = vsel %vm58, %v74, 0.0
  %v91 = vsel %vm59, %v75, 0.0
  %v92 = vsel %vm60, %v76, 0.0
  %v93 = vsel %vm61, %v77, 0.0
  %v94 = vsel %vm62, %v78, 0.0
  %v95 = vsel %vm63, %v79, 0.0
  %v96 = vsel %vm64, %v80, 0.0
  %v97 = vld [vmem:[%s2] sm:$0xff]
  %v98 = vld [vmem:[%s2 + $0x8] sm:$0xff]
  %v99 = vld [vmem:[%s2 + $0x10] sm:$0xff]
  %v100 = vld [vmem:[%s2 + $0x18] sm:$0xff]
  %v101 = vld [vmem:[%s2 + $0x20] sm:$0xff]
  %v102 = vld [vmem:[%s2 + $0x28] sm:$0xff]
  %v103 = vld [vmem:[%s2 + $0x30] sm:$0xff]
  %v104 = vld [vmem:[%s2 + $0x38] sm:$0xff]
  %v105 = vld [vmem:[%s2 + $0x40] sm:$0xff]
  %v106 = vld [vmem:[%s2 + $0x48] sm:$0xff]
  %v107 = vld [vmem:[%s2 + $0x50] sm:$0xff]
  %v108 = vld [vmem:[%s2 + $0x58] sm:$0xff]
  %v109 = vld [vmem:[%s2 + $0x60] sm:$0xff]
  %v110 = vld [vmem:[%s2 + $0x68] sm:$0xff]
  %v111 = vld [vmem:[%s2 + $0x70] sm:$0xff]
  %v112 = vld [vmem:[%s2 + $0x78] sm:$0xff]
  %v113 = vadd.f32 %v81, %v97
  %v114 = vadd.f32 %v82, %v98
  %v115 = vadd.f32 %v83, %v99
  %v116 = vadd.f32 %v84, %v100
  %v117 = vadd.f32 %v85, %v101
  %v118 = vadd.f32 %v86, %v102
  %v119 = vadd.f32 %v87, %v103
  %v120 = vadd.f32 %v88, %v104
  %v121 = vadd.f32 %v89, %v105
  %v122 = vadd.f32 %v90, %v106
  %v123 = vadd.f32 %v91, %v107
  %v124 = vadd.f32 %v92, %v108
  %v125 = vadd.f32 %v93, %v109
  %v126 = vadd.f32 %v94, %v110
  %v127 = vadd.f32 %v95, %v111
  %v128 = vadd.f32 %v96, %v112
  %129 = vst [vmem:[%s3] sm:$0xff] %v113
  %130 = vst [vmem:[%s3 + $0x8] sm:$0xff] %v114
  %131 = vst [vmem:[%s3 + $0x10] sm:$0xff] %v115
  %132 = vst [vmem:[%s3 + $0x18] sm:$0xff] %v116
  %133 = vst [vmem:[%s3 + $0x20] sm:$0xff] %v117
  %134 = vst [vmem:[%s3 + $0x28] sm:$0xff] %v118
  %135 = vst [vmem:[%s3 + $0x30] sm:$0xff] %v119
  %136 = vst [vmem:[%s3 + $0x38] sm:$0xff] %v120
  %137 = vst [vmem:[%s3 + $0x40] sm:$0xff] %v121
  %138 = vst [vmem:[%s3 + $0x48] sm:$0xff] %v122
  %139 = vst [vmem:[%s3 + $0x50] sm:$0xff] %v123
  %140 = vst [vmem:[%s3 + $0x58] sm:$0xff] %v124
  %141 = vst [vmem:[%s3 + $0x60] sm:$0xff] %v125
  %142 = vst [vmem:[%s3 + $0x68] sm:$0xff] %v126
  %143 = vst [vmem:[%s3 + $0x70] sm:$0xff] %v127
  %144 = vst [vmem:[%s3 + $0x78] sm:$0xff] %v128
  // Predicated region
  $region14: #{upsampling_bottleneck.15} parent=0 // pred_check
    _
  $region15: #{upsampling_bottleneck.15} parent=0 // pred_check_branch
    %146 = sbr.rel (0) target = $region17
  $region16: #{upsampling_bottleneck.15} parent=0 // pred_region
    _
  $region17: #{upsampling_bottleneck.15} parent=0 // pred_fallthru
    _
  // Predicated region
  $region18: #{upsampling_bottleneck.15} parent=0 // pred_check
    _
  $region19: #{upsampling_bottleneck.15} parent=0 // pred_check_branch
    %148 = sbr.rel (0) target = $region21
  $region20: #{upsampling_bottleneck.15} parent=0 // pred_region
    _
  $region21: #{upsampling_bottleneck.15} parent=0 // pred_fallthru
    _

</llo_original>
